<compile_context>
chip_gen: v6e
topology: v6e:2x2x1
jax: 0.10.0
libtpu: 0.0.40
codegen_flags: <defaults>
</compile_context>

<pallas_src>
import functools
import math
from collections import namedtuple

import jax
import jax.numpy as jnp
from jax.experimental import pallas as pl
from jax.experimental.pallas import tpu as pltpu


def _vmem_limit_bytes():
    # ~3/4 of physical VMEM capped at 96 MiB: v5e/v6e (128 MiB) -> 96 MiB,
    # v7x (64 MiB) -> 48 MiB.  Conservative 48 MiB fallback if the query fails.
    try:
        cap = pltpu.get_tpu_info().vmem_capacity_bytes
        return int(min(cap * 3 // 4, 96 * 1024 * 1024))
    except Exception:
        return 48 * 1024 * 1024


VMEM_LIMIT = _vmem_limit_bytes()

# Preferred tile sizes (fit comfortably in VMEM on v5e/v6e/v7x).
TM_PREF = 256        # matmul row tile (bf16 sublane pack = 16)
TN_PREF = 1024       # matmul output-column tile
TK_PREF = 1024       # matmul contraction tile
TSEQ_PREF = 512      # attention q/kv tile (tq == tkv)
NEG_INF = -1e30      # finite causal-mask value


def _pick_tile(dim, pref, align):
    """Largest `align`-multiple <= pref that divides dim; else the full dim."""
    if dim <= pref:
        return dim
    t = (pref // align) * align
    while t >= align:
        if dim % t == 0:
            return t
        t -= align
    return dim


# ------------- Tiled matmul (LayerNorm prologue + bias/GELU/residual epilogue)

def _linear_kernel(*refs, n_k, activation, has_bias, has_residual, has_ln,
                   transpose_w, ln_eps):
    it = iter(refs)
    x_ref = next(it)
    w_ref = next(it)
    g_ref = next(it) if has_ln else None
    bln_ref = next(it) if has_ln else None
    b_ref = next(it) if has_bias else None
    r_ref = next(it) if has_residual else None
    o_ref = next(it)
    acc_ref = next(it) if n_k > 1 else None

    k = pl.program_id(2)

    if n_k > 1:
        @pl.when(k == 0)
        def _():
            acc_ref[...] = jnp.zeros_like(acc_ref)

    x = x_ref[...]
    if has_ln:
        # Fused LayerNorm prologue (requires tk == K, i.e. n_k == 1).
        xf = x.astype(jnp.float32)
        mean = jnp.mean(xf, axis=-1, keepdims=True)
        xc = xf - mean
        var = jnp.mean(xc * xc, axis=-1, keepdims=True)
        xf = xc * jax.lax.rsqrt(var + ln_eps)
        xf = (xf * g_ref[...].astype(jnp.float32)
              + bln_ref[...].astype(jnp.float32))
        x = xf.astype(x_ref.dtype)

    if transpose_w:
        part = jax.lax.dot_general(
            x, w_ref[...],
            dimension_numbers=(((1,), (1,)), ((), ())),
            preferred_element_type=jnp.float32)
    else:
        part = jnp.dot(x, w_ref[...], preferred_element_type=jnp.float32)

    def epilogue(y):
        if has_bias:
            y = y + b_ref[...].astype(jnp.float32)
        if activation == "gelu":
            # exact (erf-based) GELU matching torch.nn.GELU() default, in f32
            y = 0.5 * y * (1.0 + jax.lax.erf(y * (1.0 / math.sqrt(2.0))))
        if has_residual:
            y = y + r_ref[...].astype(jnp.float32)
        o_ref[...] = y.astype(o_ref.dtype)

    if n_k == 1:
        epilogue(part)
    else:
        acc_ref[...] += part

        @pl.when(k == n_k - 1)
        def _():
            epilogue(acc_ref[...])


def linear(x, w, b=None, activation=None, residual=None, transpose_w=False,
           ln_g=None, ln_b=None, ln_eps=1e-5, out_dtype=None,
           tm_pref=TM_PREF, tn_pref=TN_PREF, tk_pref=TK_PREF):
    """y = LN?(x) @ w (+ b) (gelu) (+ residual); transpose_w -> x @ w.T."""
    m, kdim = x.shape
    if transpose_w:
        n, kw = w.shape
    else:
        kw, n = w.shape
    assert kw == kdim
    out_dtype = out_dtype or x.dtype
    has_ln = ln_g is not None

    tm = _pick_tile(m, tm_pref, 16)            # bf16 sublane pack alignment
    tn = _pick_tile(n, tn_pref, 128)
    tk = kdim if has_ln else _pick_tile(kdim, tk_pref, 128)
    grid = (m // tm, n // tn, kdim // tk)
    n_k = grid[2]

    in_specs = [pl.BlockSpec((tm, tk), lambda i, j, k: (i, k))]
    inputs = [x]
    if transpose_w:
        in_specs.append(pl.BlockSpec((tn, tk), lambda i, j, k: (j, k)))
    else:
        in_specs.append(pl.BlockSpec((tk, tn), lambda i, j, k: (k, j)))
    inputs.append(w)

    if has_ln:
        in_specs.append(pl.BlockSpec((1, kdim), lambda i, j, k: (0, 0)))
        inputs.append(ln_g.reshape(1, kdim))
        in_specs.append(pl.BlockSpec((1, kdim), lambda i, j, k: (0, 0)))
        inputs.append(ln_b.reshape(1, kdim))

    has_bias = b is not None
    if has_bias:
        in_specs.append(pl.BlockSpec((1, tn), lambda i, j, k: (0, j)))
        inputs.append(b.reshape(1, n))

    has_residual = residual is not None
    if has_residual:
        in_specs.append(pl.BlockSpec((tm, tn), lambda i, j, k: (i, j)))
        inputs.append(residual)

    kernel = functools.partial(
        _linear_kernel, n_k=n_k, activation=activation, has_bias=has_bias,
        has_residual=has_residual, has_ln=has_ln, transpose_w=transpose_w,
        ln_eps=float(ln_eps))

    scratch = [] if n_k == 1 else [pltpu.VMEM((tm, tn), jnp.float32)]

    return pl.pallas_call(
        kernel,
        out_shape=jax.ShapeDtypeStruct((m, n), out_dtype),
        grid=grid,
        in_specs=in_specs,
        out_specs=pl.BlockSpec((tm, tn), lambda i, j, k: (i, j)),
        scratch_shapes=scratch,
        compiler_params=pltpu.CompilerParams(
            dimension_semantics=("parallel", "parallel", "arbitrary"),
            vmem_limit_bytes=VMEM_LIMIT),
    )(*inputs)


# ---------------------- Flash attention (causal, online softmax) -------------
# Heads stay concatenated along the last (lane) dim: blocks are (1, tq, E),
# lane-dense for real model sizes (E multiple of 128).  Per-head matmuls are
# static lane slices inside the kernel; output is written back in (B, T, E)
# layout so no head split/merge transposes are needed in the wrapper.

def _flash_attn_kernel(q_ref, k_ref, v_ref, o_ref, m_sc, l_sc, acc_sc, *,
                       scale, nh, hd, t_tile):
    qi = pl.program_id(1)
    ki = pl.program_id(2)

    @pl.when(ki == 0)
    def _():
        m_sc[...] = jnp.full_like(m_sc, NEG_INF)
        l_sc[...] = jnp.zeros_like(l_sc)
        acc_sc[...] = jnp.zeros_like(acc_sc)

    # Causal block skipping (tq == tkv): only ki <= qi blocks do work.
    @pl.when(ki <= qi)
    def _():
        # Additive causal bias built once per block (head-independent).
        # Only the diagonal block (ki == qi) actually masks anything; with
        # tq == tkv the local iotas are sufficient on the diagonal.
        row = jax.lax.broadcasted_iota(jnp.int32, (t_tile, t_tile), 0)
        col = jax.lax.broadcasted_iota(jnp.int32, (t_tile, t_tile), 1)
        on_diag = ki == qi
        bias = jnp.where(jnp.logical_and(col > row, on_diag),
                         NEG_INF, 0.0).astype(jnp.float32)

        q = q_ref[0]            # (tq, E) bf16
        k = k_ref[0]            # (tkv, E)
        v = v_ref[0]

        for h in range(nh):
            sl = slice(h * hd, (h + 1) * hd)
            # S_h = Q_h K_h^T on the MXU (bf16 in, f32 out); scale in f32.
            s = jax.lax.dot_general(
                q[:, sl], k[:, sl],
                dimension_numbers=(((1,), (1,)), ((), ())),
                preferred_element_type=jnp.float32)        # (tq, tkv)
            s = s * scale + bias

            m_prev = m_sc[:, h:h + 1]
            m_new = jnp.maximum(m_prev, jnp.max(s, axis=-1, keepdims=True))
            alpha = jnp.exp(m_prev - m_new)
            p = jnp.exp(s - m_new)
            l_sc[:, h:h + 1] = (alpha * l_sc[:, h:h + 1]
                                + jnp.sum(p, axis=-1, keepdims=True))
            acc_sc[:, sl] = alpha * acc_sc[:, sl] + jnp.dot(
                p.astype(v.dtype), v[:, sl],
                preferred_element_type=jnp.float32)
            m_sc[:, h:h + 1] = m_new

    @pl.when(ki == pl.num_programs(2) - 1)
    def _():
        inv = pl.reciprocal(l_sc[...], approx=True)        # (tq, nh)
        acc = acc_sc[...]
        parts = [acc[:, h * hd:(h + 1) * hd] * inv[:, h:h + 1]
                 for h in range(nh)]
        # single lane-dense store of the whole (tq, E) output block
        o_ref[0] = jnp.concatenate(parts, axis=-1).astype(o_ref.dtype)


def flash_attention(qkv, B, T, nh):
    """qkv: (B*T, 3E) fused QKV projection.  Returns (B, T, E) attention out."""
    _, e3 = qkv.shape
    E = e3 // 3
    hd = E // nh
    scale = 1.0 / math.sqrt(hd)

    t_tile = _pick_tile(T, TSEQ_PREF, 16)      # tq == tkv (required by mask)
    nt = T // t_tile

    qkv3 = qkv.reshape(B, T, 3 * E)

    # kv index clamped to min(j, i): causally-skipped steps reuse the resident
    # K/V block -> no extra DMA for skipped blocks.
    if E % 128 == 0:
        # Lane-aligned column blocks: consume the packed QKV tensor directly
        # (no split copies).  Block index along the last dim is in units of E.
        inputs = (qkv3, qkv3, qkv3)
        q_spec = pl.BlockSpec((1, t_tile, E), lambda b, i, j: (b, i, 0))
        k_spec = pl.BlockSpec((1, t_tile, E),
                              lambda b, i, j: (b, jnp.minimum(j, i), 1))
        v_spec = pl.BlockSpec((1, t_tile, E),
                              lambda b, i, j: (b, jnp.minimum(j, i), 2))
    else:
        # Small-E fallback (keeps the (8,128) block rule: full last dim).
        inputs = (qkv3[:, :, :E], qkv3[:, :, E:2 * E], qkv3[:, :, 2 * E:])
        q_spec = pl.BlockSpec((1, t_tile, E), lambda b, i, j: (b, i, 0))
        k_spec = pl.BlockSpec((1, t_tile, E),
                              lambda b, i, j: (b, jnp.minimum(j, i), 0))
        v_spec = k_spec

    out_spec = pl.BlockSpec((1, t_tile, E), lambda b, i, j: (b, i, 0))

    return pl.pallas_call(
        functools.partial(_flash_attn_kernel, scale=scale, nh=nh, hd=hd,
                          t_tile=t_tile),
        out_shape=jax.ShapeDtypeStruct((B, T, E), qkv.dtype),
        grid=(B, nt, nt),
        in_specs=[q_spec, k_spec, v_spec],
        out_specs=out_spec,
        scratch_shapes=[pltpu.VMEM((t_tile, nh), jnp.float32),   # m
                        pltpu.VMEM((t_tile, nh), jnp.float32),   # l
                        pltpu.VMEM((t_tile, E), jnp.float32)],   # acc
        compiler_params=pltpu.CompilerParams(
            # kv axis must stay innermost + "arbitrary" (scratch carries state)
            dimension_semantics=("parallel", "parallel", "arbitrary"),
            vmem_limit_bytes=VMEM_LIMIT),
    )(*inputs)


# ----------------------------- model / params --------------------------------

Config = namedtuple(
    "Config",
    ["VOCAB", "EMBED", "N_HEAD", "LAYERS", "FF_EXP", "BLOCK_SIZE",
     "MAX_POS_EMBED", "bias", "EPS", "ROTARY_EMBED", "RMS_NORM", "MoE",
     "SWIGLU", "EMBED_DROPOUT", "ATTN_DROPOUT", "RESID_DROPOUT",
     "FC_DROPOUT", "DROPOUT"],
)


def init_params(key, cfg, dtype=jnp.bfloat16):
    """Deterministic parameter init mirroring GPT2Model._init_weights."""
    E, V = cfg.EMBED, cfg.VOCAB
    H = cfg.FF_EXP * E
    std = 0.02
    proj_std = 0.02 / math.sqrt(2 * cfg.LAYERS)   # c_proj.weight special init

    keys = iter(jax.random.split(key, 2 + 4 * cfg.LAYERS))
    nrm = lambda k, shape, s: (s * jax.random.normal(k, shape, jnp.float32)
                               ).astype(dtype)

    params = {
        "wte": nrm(next(keys), (V, E), std),                 # tied with lm_head
        "wpe": nrm(next(keys), (cfg.MAX_POS_EMBED, E), std),
        "lnf_g": jnp.ones((E,), dtype),
        "lnf_b": jnp.zeros((E,), dtype),
        "layers": [],
    }
    for _ in range(cfg.LAYERS):
        params["layers"].append({
            "ln1_g": jnp.ones((E,), dtype), "ln1_b": jnp.zeros((E,), dtype),
            "c_attn_w": nrm(next(keys), (E, 3 * E), std),
            "c_attn_b": jnp.zeros((3 * E,), dtype),
            "attn_proj_w": nrm(next(keys), (E, E), proj_std),
            "attn_proj_b": jnp.zeros((E,), dtype),
            "ln2_g": jnp.ones((E,), dtype), "ln2_b": jnp.zeros((E,), dtype),
            "c_fc_w": nrm(next(keys), (E, H), std),
            "c_fc_b": jnp.zeros((H,), dtype),
            "mlp_proj_w": nrm(next(keys), (H, E), proj_std),
            "mlp_proj_b": jnp.zeros((E,), dtype),
        })
    return params


def gpt2_forward(idx, params, cfg):
    """Matches GPT2Model.forward(idx, targets=None) -> (logits, None)."""
    B, T = idx.shape
    assert T <= cfg.BLOCK_SIZE
    E, nh = cfg.EMBED, cfg.N_HEAD

    # token + position embeddings (gathers are glue -> plain JAX)
    x = params["wte"][idx] + params["wpe"][:T][None, :, :]        # (B,T,E) bf16
    # TODO(synk): dropout layers are identity here (p=0 / eval semantics).

    x2d = x.reshape(B * T, E)
    for lp in params["layers"]:
        # attention: fused LN1 + QKV matmul -> flash attention -> proj+residual
        qkv = linear(x2d, lp["c_attn_w"], lp["c_attn_b"],
                     ln_g=lp["ln1_g"], ln_b=lp["ln1_b"], ln_eps=cfg.EPS)
        y = flash_attention(qkv, B, T, nh)                        # (B,T,E)
        x2d = linear(y.reshape(B * T, E), lp["attn_proj_w"], lp["attn_proj_b"],
                     residual=x2d)                                # x + attn(ln1(x))

        # MLP: fused LN2 + c_fc matmul + GELU -> proj+residual
        ff = linear(x2d, lp["c_fc_w"], lp["c_fc_b"], activation="gelu",
                    ln_g=lp["ln2_g"], ln_b=lp["ln2_b"], ln_eps=cfg.EPS)
        x2d = linear(ff, lp["mlp_proj_w"], lp["mlp_proj_b"],
                     residual=x2d)                                # x + mlp(ln2(x))

    # Inference path: lm_head on the last position only (LN is row-wise, so
    # slicing before ln_f is exact).  ln_f fused into the lm_head matmul;
    # tied weights used via a transposed contraction (no wte.T materialized).
    x_last = x2d.reshape(B, T, E)[:, -1, :]                       # (B, E)
    logits = linear(x_last, params["wte"], transpose_w=True,
                    ln_g=params["lnf_g"], ln_b=params["lnf_b"], ln_eps=1e-5,
                    out_dtype=jnp.float32, tn_pref=2048)          # (B, V)
    logits = logits.reshape(B, 1, cfg.VOCAB)
    return logits, None


# --------------------------------- main ---------------------------------------

if __name__ == "__main__":
    cfg = Config(
        VOCAB=64, EMBED=32, N_HEAD=4, LAYERS=2, FF_EXP=4,
        BLOCK_SIZE=16, MAX_POS_EMBED=16, bias=True, EPS=1e-5,
        ROTARY_EMBED=0, RMS_NORM=0, MoE=0, SWIGLU=0,
        EMBED_DROPOUT=0.0, ATTN_DROPOUT=0.0, RESID_DROPOUT=0.0,
        FC_DROPOUT=0.0, DROPOUT=0.0,
    )

    key = jax.random.PRNGKey(0)
    k_params, k_idx = jax.random.split(key)
    params = init_params(k_params, cfg)

    B, T = 2, 8
    idx = jax.random.randint(k_idx, (B, T), 0, cfg.VOCAB, dtype=jnp.int32)

    fwd = jax.jit(lambda i, p: gpt2_forward(i, p, cfg))
    logits, loss = fwd(idx, params)
    logits = jax.block_until_ready(logits)

    assert logits.shape == (B, 1, cfg.VOCAB)
    assert loss is None
    assert bool(jnp.all(jnp.isfinite(logits)))
    print("KERNEL_OK")
</pallas_src>

<mosaic_0001>
module attributes {stable_mosaic.version = 11 : i64} {
  func.func @_linear_kernel(%arg0: i32, %arg1: i32, %arg2: i32, %arg3: memref<16x32xbf16, #tpu.memory_space<vmem>>, %arg4: memref<32x96xbf16, #tpu.memory_space<vmem>>, %arg5: memref<1x32xbf16, #tpu.memory_space<vmem>>, %arg6: memref<1x32xbf16, #tpu.memory_space<vmem>>, %arg7: memref<1x96xbf16, #tpu.memory_space<vmem>>, %arg8: memref<16x96xbf16, #tpu.memory_space<vmem>>) attributes {dimension_semantics = [#tpu.dimension_semantics<parallel>, #tpu.dimension_semantics<parallel>, #tpu.dimension_semantics<arbitrary>], iteration_bounds = array<i64: 1, 1, 1>, scalar_prefetch = 0 : i64, scratch_operands = 0 : i64, tpu.core_type = #tpu.core_type<tc>, window_params = [{transform_indices = @transform_0, window_bounds = array<i64: 16, 32>}, {transform_indices = @transform_1, window_bounds = array<i64: 32, 96>}, {pipeline_mode = #tpu.pipeline_mode<synchronous>, transform_indices = @transform_2, window_bounds = array<i64: 1, 32>}, {pipeline_mode = #tpu.pipeline_mode<synchronous>, transform_indices = @transform_3, window_bounds = array<i64: 1, 32>}, {transform_indices = @transform_4, window_bounds = array<i64: 1, 96>}, {transform_indices = @transform_5, window_bounds = array<i64: 16, 96>}]} {
    %c0 = arith.constant 0 : index
    %c0_0 = arith.constant 0 : index
    %0 = vector.load %arg3[%c0, %c0_0] : memref<16x32xbf16, #tpu.memory_space<vmem>>, vector<16x32xbf16>
    %1 = arith.extf %0 : vector<16x32xbf16> to vector<16x32xf32>
    %cst = arith.constant dense<0.000000e+00> : vector<16xf32>
    %2 = vector.multi_reduction <add>, %1, %cst [1] : vector<16x32xf32> to vector<16xf32>
    %3 = vector.shape_cast %2 : vector<16xf32> to vector<16x1xf32>
    %cst_1 = arith.constant 3.200000e+01 : f32
    %4 = vector.broadcast %cst_1 : f32 to vector<16x1xf32>
    %5 = arith.divf %3, %4 : vector<16x1xf32>
    %6 = vector.broadcast %5 : vector<16x1xf32> to vector<16x32xf32>
    %7 = arith.subf %1, %6 : vector<16x32xf32>
    %8 = arith.mulf %7, %7 : vector<16x32xf32>
    %cst_2 = arith.constant dense<0.000000e+00> : vector<16xf32>
    %9 = vector.multi_reduction <add>, %8, %cst_2 [1] : vector<16x32xf32> to vector<16xf32>
    %10 = vector.shape_cast %9 : vector<16xf32> to vector<16x1xf32>
    %cst_3 = arith.constant 3.200000e+01 : f32
    %11 = vector.broadcast %cst_3 : f32 to vector<16x1xf32>
    %12 = arith.divf %10, %11 : vector<16x1xf32>
    %cst_4 = arith.constant 9.99999974E-6 : f32
    %13 = vector.broadcast %cst_4 : f32 to vector<16x1xf32>
    %14 = arith.addf %12, %13 : vector<16x1xf32>
    %15 = math.rsqrt %14 : vector<16x1xf32>
    %16 = vector.broadcast %15 : vector<16x1xf32> to vector<16x32xf32>
    %17 = arith.mulf %7, %16 : vector<16x32xf32>
    %c0_5 = arith.constant 0 : index
    %c0_6 = arith.constant 0 : index
    %18 = vector.load %arg5[%c0_5, %c0_6] : memref<1x32xbf16, #tpu.memory_space<vmem>>, vector<1x32xbf16>
    %19 = arith.extf %18 : vector<1x32xbf16> to vector<1x32xf32>
    %20 = vector.broadcast %19 : vector<1x32xf32> to vector<16x32xf32>
    %21 = arith.mulf %17, %20 : vector<16x32xf32>
    %c0_7 = arith.constant 0 : index
    %c0_8 = arith.constant 0 : index
    %22 = vector.load %arg6[%c0_7, %c0_8] : memref<1x32xbf16, #tpu.memory_space<vmem>>, vector<1x32xbf16>
    %23 = arith.extf %22 : vector<1x32xbf16> to vector<1x32xf32>
    %24 = vector.broadcast %23 : vector<1x32xf32> to vector<16x32xf32>
    %25 = arith.addf %21, %24 : vector<16x32xf32>
    %26 = arith.truncf %25 : vector<16x32xf32> to vector<16x32xbf16>
    %c0_9 = arith.constant 0 : index
    %c0_10 = arith.constant 0 : index
    %27 = vector.load %arg4[%c0_9, %c0_10] : memref<32x96xbf16, #tpu.memory_space<vmem>>, vector<32x96xbf16>
    %cst_11 = arith.constant dense<0.000000e+00> : vector<16x96xf32>
    %28 = tpu.matmul %26, %27, %cst_11 {dimension_numbers = #tpu.dot_dimension_numbers<[1], [0], [0], [1], [0, 0, 1, 1], [], []>} : vector<16x32xbf16>, vector<32x96xbf16>, vector<16x96xf32> -> vector<16x96xf32>
    %c0_12 = arith.constant 0 : index
    %c0_13 = arith.constant 0 : index
    %29 = vector.load %arg7[%c0_12, %c0_13] : memref<1x96xbf16, #tpu.memory_space<vmem>>, vector<1x96xbf16>
    %30 = arith.extf %29 : vector<1x96xbf16> to vector<1x96xf32>
    %31 = vector.broadcast %30 : vector<1x96xf32> to vector<16x96xf32>
    %32 = arith.addf %28, %31 : vector<16x96xf32>
    %33 = arith.truncf %32 : vector<16x96xf32> to vector<16x96xbf16>
    %c0_14 = arith.constant 0 : index
    %c0_15 = arith.constant 0 : index
    %34 = vector.load %arg8[%c0_14, %c0_15] : memref<16x96xbf16, #tpu.memory_space<vmem>>, vector<16x96xbf16>
    tpu.vector_store %arg8[%c0_14, %c0_15], %33 {strides = array<i32>} : memref<16x96xbf16, #tpu.memory_space<vmem>>, vector<16x96xbf16>,
    return
  }
  func.func @transform_0(%arg0: i32, %arg1: i32, %arg2: i32) -> (i32, i32) {
    %c0_i32 = arith.constant 0 : i32
    return %arg0, %arg2 : i32, i32
  }
  func.func @transform_1(%arg0: i32, %arg1: i32, %arg2: i32) -> (i32, i32) {
    %c0_i32 = arith.constant 0 : i32
    return %arg2, %arg1 : i32, i32
  }
  func.func @transform_2(%arg0: i32, %arg1: i32, %arg2: i32) -> (i32, i32) {
    %c0_i32 = arith.constant 0 : i32
    %c0_i32_0 = arith.constant 0 : i32
    %c0_i32_1 = arith.constant 0 : i32
    return %c0_i32, %c0_i32_0 : i32, i32
  }
  func.func @transform_3(%arg0: i32, %arg1: i32, %arg2: i32) -> (i32, i32) {
    %c0_i32 = arith.constant 0 : i32
    %c0_i32_0 = arith.constant 0 : i32
    %c0_i32_1 = arith.constant 0 : i32
    return %c0_i32, %c0_i32_0 : i32, i32
  }
  func.func @transform_4(%arg0: i32, %arg1: i32, %arg2: i32) -> (i32, i32) {
    %c0_i32 = arith.constant 0 : i32
    %c0_i32_0 = arith.constant 0 : i32
    return %c0_i32, %arg1 : i32, i32
  }
  func.func @transform_5(%arg0: i32, %arg1: i32, %arg2: i32) -> (i32, i32) {
    %c0_i32 = arith.constant 0 : i32
    return %arg0, %arg1 : i32, i32
  }
}

module attributes {stable_mosaic.version = 11 : i64} {
  func.func @_flash_attn_kernel(%arg0: i32, %arg1: i32, %arg2: i32, %arg3: memref<1x8x32xbf16, #tpu.memory_space<vmem>>, %arg4: memref<1x8x32xbf16, #tpu.memory_space<vmem>>, %arg5: memref<1x8x32xbf16, #tpu.memory_space<vmem>>, %arg6: memref<1x8x32xbf16, #tpu.memory_space<vmem>>, %arg7: memref<8x4xf32, #tpu.memory_space<vmem>>, %arg8: memref<8x4xf32, #tpu.memory_space<vmem>>, %arg9: memref<8x32xf32, #tpu.memory_space<vmem>>) attributes {dimension_semantics = [#tpu.dimension_semantics<parallel>, #tpu.dimension_semantics<parallel>, #tpu.dimension_semantics<arbitrary>], iteration_bounds = array<i64: 2, 1, 1>, scalar_prefetch = 0 : i64, scratch_operands = 3 : i64, tpu.core_type = #tpu.core_type<tc>, window_params = [{transform_indices = @transform_0, window_bounds = array<i64: 1, 8, 32>}, {transform_indices = @transform_1, window_bounds = array<i64: 1, 8, 32>}, {transform_indices = @transform_2, window_bounds = array<i64: 1, 8, 32>}, {transform_indices = @transform_3, window_bounds = array<i64: 1, 8, 32>}]} {
    %c0_i32 = arith.constant 0 : i32
    %0 = arith.cmpi eq, %arg2, %c0_i32 : i32
    %1 = arith.extui %0 : i1 to i32
    %c0_i32_0 = arith.constant 0 : i32
    %2 = arith.cmpi ne, %1, %c0_i32_0 : i32
    scf.if %2 {
      %cst = arith.constant -1.000000e+30 : f32
      %9 = vector.broadcast %cst : f32 to vector<8x4xf32>
      %c0 = arith.constant 0 : index
      %c0_4 = arith.constant 0 : index
      %10 = vector.load %arg7[%c0, %c0_4] : memref<8x4xf32, #tpu.memory_space<vmem>>, vector<8x4xf32>
      tpu.vector_store %arg7[%c0, %c0_4], %9 {strides = array<i32>} : memref<8x4xf32, #tpu.memory_space<vmem>>, vector<8x4xf32>,
      %cst_5 = arith.constant 0.000000e+00 : f32
      %11 = vector.broadcast %cst_5 : f32 to vector<8x4xf32>
      %c0_6 = arith.constant 0 : index
      %c0_7 = arith.constant 0 : index
      %12 = vector.load %arg8[%c0_6, %c0_7] : memref<8x4xf32, #tpu.memory_space<vmem>>, vector<8x4xf32>
      tpu.vector_store %arg8[%c0_6, %c0_7], %11 {strides = array<i32>} : memref<8x4xf32, #tpu.memory_space<vmem>>, vector<8x4xf32>,
      %cst_8 = arith.constant 0.000000e+00 : f32
      %13 = vector.broadcast %cst_8 : f32 to vector<8x32xf32>
      %c0_9 = arith.constant 0 : index
      %c0_10 = arith.constant 0 : index
      %14 = vector.load %arg9[%c0_9, %c0_10] : memref<8x32xf32, #tpu.memory_space<vmem>>, vector<8x32xf32>
      tpu.vector_store %arg9[%c0_9, %c0_10], %13 {strides = array<i32>} : memref<8x32xf32, #tpu.memory_space<vmem>>, vector<8x32xf32>,
    } else {
    }
    %3 = arith.cmpi sle, %arg2, %arg1 : i32
    %4 = arith.extui %3 : i1 to i32
    %c0_i32_1 = arith.constant 0 : i32
    %5 = arith.cmpi ne, %4, %c0_i32_1 : i32
    scf.if %5 {
      %9 = tpu.iota {dimensions = array<i32: 0>} : vector<8x8xi32>
      %10 = tpu.iota {dimensions = array<i32: 1>} : vector<8x8xi32>
      %11 = arith.cmpi eq, %arg2, %arg1 : i32
      %12 = arith.cmpi sgt, %10, %9 : vector<8x8xi32>
      %13 = vector.broadcast %11 : i1 to vector<8x8xi1>
      %14 = arith.andi %12, %13 : vector<8x8xi1>
      %cst = arith.constant -1.000000e+30 : f32
      %cst_4 = arith.constant 0.000000e+00 : f32
      %15 = vector.broadcast %cst : f32 to vector<8x8xf32>
      %16 = vector.broadcast %cst_4 : f32 to vector<8x8xf32>
      %17 = arith.select %14, %15, %16 : vector<8x8xi1>, vector<8x8xf32>
      %c0 = arith.constant 0 : index
      %c0_5 = arith.constant 0 : index
      %c0_6 = arith.constant 0 : index
      %18 = vector.load %arg3[%c0, %c0_5, %c0_6] : memref<1x8x32xbf16, #tpu.memory_space<vmem>>, vector<1x8x32xbf16>
      %19 = vector.shape_cast %18 : vector<1x8x32xbf16> to vector<8x32xbf16>
      %c0_7 = arith.constant 0 : index
      %c0_8 = arith.constant 0 : index
      %c0_9 = arith.constant 0 : index
      %20 = vector.load %arg4[%c0_7, %c0_8, %c0_9] : memref<1x8x32xbf16, #tpu.memory_space<vmem>>, vector<1x8x32xbf16>
      %21 = vector.shape_cast %20 : vector<1x8x32xbf16> to vector<8x32xbf16>
      %c0_10 = arith.constant 0 : index
      %c0_11 = arith.constant 0 : index
      %c0_12 = arith.constant 0 : index
      %22 = vector.load %arg5[%c0_10, %c0_11, %c0_12] : memref<1x8x32xbf16, #tpu.memory_space<vmem>>, vector<1x8x32xbf16>
      %23 = vector.shape_cast %22 : vector<1x8x32xbf16> to vector<8x32xbf16>
      %24 = vector.extract_strided_slice %19 {offsets = [0, 0], sizes = [8, 8], strides = [1, 1]} : vector<8x32xbf16> to vector<8x8xbf16>
      %25 = vector.extract_strided_slice %21 {offsets = [0, 0], sizes = [8, 8], strides = [1, 1]} : vector<8x32xbf16> to vector<8x8xbf16>
      %cst_13 = arith.constant dense<0.000000e+00> : vector<8x8xf32>
      %26 = tpu.matmul %24, %25, %cst_13 {dimension_numbers = #tpu.dot_dimension_numbers<[1], [1], [0], [0], [0, 0, 1, 0], [], []>} : vector<8x8xbf16>, vector<8x8xbf16>, vector<8x8xf32> -> vector<8x8xf32>
      %cst_14 = arith.constant 0.353553385 : f32
      %27 = vector.broadcast %cst_14 : f32 to vector<8x8xf32>
      %28 = arith.mulf %26, %27 : vector<8x8xf32>
      %29 = arith.addf %28, %17 : vector<8x8xf32>
      %c0_15 = arith.constant 0 : index
      %c0_16 = arith.constant 0 : index
      %30 = vector.load %arg7[%c0_15, %c0_16] : memref<8x4xf32, #tpu.memory_space<vmem>>, vector<8x1xf32>
      %cst_17 = arith.constant dense<0xFF800000> : vector<8xf32>
      %31 = vector.multi_reduction <maximumf>, %29, %cst_17 [1] : vector<8x8xf32> to vector<8xf32>
      %32 = vector.shape_cast %31 : vector<8xf32> to vector<8x1xf32>
      %33 = arith.maximumf %30, %32 : vector<8x1xf32>
      %34 = arith.subf %30, %33 : vector<8x1xf32>
      %35 = math.exp %34 : vector<8x1xf32>
      %36 = vector.broadcast %33 : vector<8x1xf32> to vector<8x8xf32>
      %37 = arith.subf %29, %36 : vector<8x8xf32>
      %38 = math.exp %37 : vector<8x8xf32>
      %c0_18 = arith.constant 0 : index
      %c0_19 = arith.constant 0 : index
      %39 = vector.load %arg8[%c0_18, %c0_19] : memref<8x4xf32, #tpu.memory_space<vmem>>, vector<8x1xf32>
      %40 = arith.mulf %35, %39 : vector<8x1xf32>
      %cst_20 = arith.constant dense<0.000000e+00> : vector<8xf32>
      %41 = vector.multi_reduction <add>, %38, %cst_20 [1] : vector<8x8xf32> to vector<8xf32>
      %42 = vector.shape_cast %41 : vector<8xf32> to vector<8x1xf32>
      %43 = arith.addf %40, %42 : vector<8x1xf32>
      %c0_21 = arith.constant 0 : index
      %c0_22 = arith.constant 0 : index
      %44 = vector.load %arg8[%c0_21, %c0_22] : memref<8x4xf32, #tpu.memory_space<vmem>>, vector<8x1xf32>
      tpu.vector_store %arg8[%c0_21, %c0_22], %43 {strides = array<i32>} : memref<8x4xf32, #tpu.memory_space<vmem>>, vector<8x1xf32>,
      %c0_23 = arith.constant 0 : index
      %c0_24 = arith.constant 0 : index
      %45 = vector.load %arg9[%c0_23, %c0_24] : memref<8x32xf32, #tpu.memory_space<vmem>>, vector<8x8xf32>
      %46 = vector.broadcast %35 : vector<8x1xf32> to vector<8x8xf32>
      %47 = arith.mulf %46, %45 : vector<8x8xf32>
      %48 = arith.truncf %38 : vector<8x8xf32> to vector<8x8xbf16>
      %49 = vector.extract_strided_slice %23 {offsets = [0, 0], sizes = [8, 8], strides = [1, 1]} : vector<8x32xbf16> to vector<8x8xbf16>
      %cst_25 = arith.constant dense<0.000000e+00> : vector<8x8xf32>
      %50 = tpu.matmul %48, %49, %cst_25 {dimension_numbers = #tpu.dot_dimension_numbers<[1], [0], [0], [1], [0, 0, 1, 1], [], []>} : vector<8x8xbf16>, vector<8x8xbf16>, vector<8x8xf32> -> vector<8x8xf32>
      %51 = arith.addf %47, %50 : vector<8x8xf32>
      %c0_26 = arith.constant 0 : index
      %c0_27 = arith.constant 0 : index
      %52 = vector.load %arg9[%c0_26, %c0_27] : memref<8x32xf32, #tpu.memory_space<vmem>>, vector<8x8xf32>
      tpu.vector_store %arg9[%c0_26, %c0_27], %51 {strides = array<i32>} : memref<8x32xf32, #tpu.memory_space<vmem>>, vector<8x8xf32>,
      %c0_28 = arith.constant 0 : index
      %c0_29 = arith.constant 0 : index
      %53 = vector.load %arg7[%c0_28, %c0_29] : memref<8x4xf32, #tpu.memory_space<vmem>>, vector<8x1xf32>
      tpu.vector_store %arg7[%c0_28, %c0_29], %33 {strides = array<i32>} : memref<8x4xf32, #tpu.memory_space<vmem>>, vector<8x1xf32>,
      %54 = vector.extract_strided_slice %19 {offsets = [0, 8], sizes = [8, 8], strides = [1, 1]} : vector<8x32xbf16> to vector<8x8xbf16>
      %55 = vector.extract_strided_slice %21 {offsets = [0, 8], sizes = [8, 8], strides = [1, 1]} : vector<8x32xbf16> to vector<8x8xbf16>
      %cst_30 = arith.constant dense<0.000000e+00> : vector<8x8xf32>
      %56 = tpu.matmul %54, %55, %cst_30 {dimension_numbers = #tpu.dot_dimension_numbers<[1], [1], [0], [0], [0, 0, 1, 0], [], []>} : vector<8x8xbf16>, vector<8x8xbf16>, vector<8x8xf32> -> vector<8x8xf32>
      %cst_31 = arith.constant 0.353553385 : f32
      %57 = vector.broadcast %cst_31 : f32 to vector<8x8xf32>
      %58 = arith.mulf %56, %57 : vector<8x8xf32>
      %59 = arith.addf %58, %17 : vector<8x8xf32>
      %c0_32 = arith.constant 0 : index
      %c1 = arith.constant 1 : index
      %60 = vector.load %arg7[%c0_32, %c1] : memref<8x4xf32, #tpu.memory_space<vmem>>, vector<8x1xf32>
      %cst_33 = arith.constant dense<0xFF800000> : vector<8xf32>
      %61 = vector.multi_reduction <maximumf>, %59, %cst_33 [1] : vector<8x8xf32> to vector<8xf32>
      %62 = vector.shape_cast %61 : vector<8xf32> to vector<8x1xf32>
      %63 = arith.maximumf %60, %62 : vector<8x1xf32>
      %64 = arith.subf %60, %63 : vector<8x1xf32>
      %65 = math.exp %64 : vector<8x1xf32>
      %66 = vector.broadcast %63 : vector<8x1xf32> to vector<8x8xf32>
      %67 = arith.subf %59, %66 : vector<8x8xf32>
      %68 = math.exp %67 : vector<8x8xf32>
      %c0_34 = arith.constant 0 : index
      %c1_35 = arith.constant 1 : index
      %69 = vector.load %arg8[%c0_34, %c1_35] : memref<8x4xf32, #tpu.memory_space<vmem>>, vector<8x1xf32>
      %70 = arith.mulf %65, %69 : vector<8x1xf32>
      %cst_36 = arith.constant dense<0.000000e+00> : vector<8xf32>
      %71 = vector.multi_reduction <add>, %68, %cst_36 [1] : vector<8x8xf32> to vector<8xf32>
      %72 = vector.shape_cast %71 : vector<8xf32> to vector<8x1xf32>
      %73 = arith.addf %70, %72 : vector<8x1xf32>
      %c0_37 = arith.constant 0 : index
      %c1_38 = arith.constant 1 : index
      %74 = vector.load %arg8[%c0_37, %c1_38] : memref<8x4xf32, #tpu.memory_space<vmem>>, vector<8x1xf32>
      tpu.vector_store %arg8[%c0_37, %c1_38], %73 {strides = array<i32>} : memref<8x4xf32, #tpu.memory_space<vmem>>, vector<8x1xf32>,
      %c0_39 = arith.constant 0 : index
      %c8 = arith.constant 8 : index
      %75 = vector.load %arg9[%c0_39, %c8] : memref<8x32xf32, #tpu.memory_space<vmem>>, vector<8x8xf32>
      %76 = vector.broadcast %65 : vector<8x1xf32> to vector<8x8xf32>
      %77 = arith.mulf %76, %75 : vector<8x8xf32>
      %78 = arith.truncf %68 : vector<8x8xf32> to vector<8x8xbf16>
      %79 = vector.extract_strided_slice %23 {offsets = [0, 8], sizes = [8, 8], strides = [1, 1]} : vector<8x32xbf16> to vector<8x8xbf16>
      %cst_40 = arith.constant dense<0.000000e+00> : vector<8x8xf32>
      %80 = tpu.matmul %78, %79, %cst_40 {dimension_numbers = #tpu.dot_dimension_numbers<[1], [0], [0], [1], [0, 0, 1, 1], [], []>} : vector<8x8xbf16>, vector<8x8xbf16>, vector<8x8xf32> -> vector<8x8xf32>
      %81 = arith.addf %77, %80 : vector<8x8xf32>
      %c0_41 = arith.constant 0 : index
      %c8_42 = arith.constant 8 : index
      %82 = vector.load %arg9[%c0_41, %c8_42] : memref<8x32xf32, #tpu.memory_space<vmem>>, vector<8x8xf32>
      tpu.vector_store %arg9[%c0_41, %c8_42], %81 {strides = array<i32>} : memref<8x32xf32, #tpu.memory_space<vmem>>, vector<8x8xf32>,
      %c0_43 = arith.constant 0 : index
      %c1_44 = arith.constant 1 : index
      %83 = vector.load %arg7[%c0_43, %c1_44] : memref<8x4xf32, #tpu.memory_space<vmem>>, vector<8x1xf32>
      tpu.vector_store %arg7[%c0_43, %c1_44], %63 {strides = array<i32>} : memref<8x4xf32, #tpu.memory_space<vmem>>, vector<8x1xf32>,
      %84 = vector.extract_strided_slice %19 {offsets = [0, 16], sizes = [8, 8], strides = [1, 1]} : vector<8x32xbf16> to vector<8x8xbf16>
      %85 = vector.extract_strided_slice %21 {offsets = [0, 16], sizes = [8, 8], strides = [1, 1]} : vector<8x32xbf16> to vector<8x8xbf16>
      %cst_45 = arith.constant dense<0.000000e+00> : vector<8x8xf32>
      %86 = tpu.matmul %84, %85, %cst_45 {dimension_numbers = #tpu.dot_dimension_numbers<[1], [1], [0], [0], [0, 0, 1, 0], [], []>} : vector<8x8xbf16>, vector<8x8xbf16>, vector<8x8xf32> -> vector<8x8xf32>
      %cst_46 = arith.constant 0.353553385 : f32
      %87 = vector.broadcast %cst_46 : f32 to vector<8x8xf32>
      %88 = arith.mulf %86, %87 : vector<8x8xf32>
      %89 = arith.addf %88, %17 : vector<8x8xf32>
      %c0_47 = arith.constant 0 : index
      %c2 = arith.constant 2 : index
      %90 = vector.load %arg7[%c0_47, %c2] : memref<8x4xf32, #tpu.memory_space<vmem>>, vector<8x1xf32>
      %cst_48 = arith.constant dense<0xFF800000> : vector<8xf32>
      %91 = vector.multi_reduction <maximumf>, %89, %cst_48 [1] : vector<8x8xf32> to vector<8xf32>
      %92 = vector.shape_cast %91 : vector<8xf32> to vector<8x1xf32>
      %93 = arith.maximumf %90, %92 : vector<8x1xf32>
      %94 = arith.subf %90, %93 : vector<8x1xf32>
      %95 = math.exp %94 : vector<8x1xf32>
      %96 = vector.broadcast %93 : vector<8x1xf32> to vector<8x8xf32>
      %97 = arith.subf %89, %96 : vector<8x8xf32>
      %98 = math.exp %97 : vector<8x8xf32>
      %c0_49 = arith.constant 0 : index
      %c2_50 = arith.constant 2 : index
      %99 = vector.load %arg8[%c0_49, %c2_50] : memref<8x4xf32, #tpu.memory_space<vmem>>, vector<8x1xf32>
      %100 = arith.mulf %95, %99 : vector<8x1xf32>
      %cst_51 = arith.constant dense<0.000000e+00> : vector<8xf32>
      %101 = vector.multi_reduction <add>, %98, %cst_51 [1] : vector<8x8xf32> to vector<8xf32>
      %102 = vector.shape_cast %101 : vector<8xf32> to vector<8x1xf32>
      %103 = arith.addf %100, %102 : vector<8x1xf32>
      %c0_52 = arith.constant 0 : index
      %c2_53 = arith.constant 2 : index
      %104 = vector.load %arg8[%c0_52, %c2_53] : memref<8x4xf32, #tpu.memory_space<vmem>>, vector<8x1xf32>
      tpu.vector_store %arg8[%c0_52, %c2_53], %103 {strides = array<i32>} : memref<8x4xf32, #tpu.memory_space<vmem>>, vector<8x1xf32>,
      %c0_54 = arith.constant 0 : index
      %c16 = arith.constant 16 : index
      %105 = vector.load %arg9[%c0_54, %c16] : memref<8x32xf32, #tpu.memory_space<vmem>>, vector<8x8xf32>
      %106 = vector.broadcast %95 : vector<8x1xf32> to vector<8x8xf32>
      %107 = arith.mulf %106, %105 : vector<8x8xf32>
      %108 = arith.truncf %98 : vector<8x8xf32> to vector<8x8xbf16>
      %109 = vector.extract_strided_slice %23 {offsets = [0, 16], sizes = [8, 8], strides = [1, 1]} : vector<8x32xbf16> to vector<8x8xbf16>
      %cst_55 = arith.constant dense<0.000000e+00> : vector<8x8xf32>
      %110 = tpu.matmul %108, %109, %cst_55 {dimension_numbers = #tpu.dot_dimension_numbers<[1], [0], [0], [1], [0, 0, 1, 1], [], []>} : vector<8x8xbf16>, vector<8x8xbf16>, vector<8x8xf32> -> vector<8x8xf32>
      %111 = arith.addf %107, %110 : vector<8x8xf32>
      %c0_56 = arith.constant 0 : index
      %c16_57 = arith.constant 16 : index
      %112 = vector.load %arg9[%c0_56, %c16_57] : memref<8x32xf32, #tpu.memory_space<vmem>>, vector<8x8xf32>
      tpu.vector_store %arg9[%c0_56, %c16_57], %111 {strides = array<i32>} : memref<8x32xf32, #tpu.memory_space<vmem>>, vector<8x8xf32>,
      %c0_58 = arith.constant 0 : index
      %c2_59 = arith.constant 2 : index
      %113 = vector.load %arg7[%c0_58, %c2_59] : memref<8x4xf32, #tpu.memory_space<vmem>>, vector<8x1xf32>
      tpu.vector_store %arg7[%c0_58, %c2_59], %93 {strides = array<i32>} : memref<8x4xf32, #tpu.memory_space<vmem>>, vector<8x1xf32>,
      %114 = vector.extract_strided_slice %19 {offsets = [0, 24], sizes = [8, 8], strides = [1, 1]} : vector<8x32xbf16> to vector<8x8xbf16>
      %115 = vector.extract_strided_slice %21 {offsets = [0, 24], sizes = [8, 8], strides = [1, 1]} : vector<8x32xbf16> to vector<8x8xbf16>
      %cst_60 = arith.constant dense<0.000000e+00> : vector<8x8xf32>
      %116 = tpu.matmul %114, %115, %cst_60 {dimension_numbers = #tpu.dot_dimension_numbers<[1], [1], [0], [0], [0, 0, 1, 0], [], []>} : vector<8x8xbf16>, vector<8x8xbf16>, vector<8x8xf32> -> vector<8x8xf32>
      %cst_61 = arith.constant 0.353553385 : f32
      %117 = vector.broadcast %cst_61 : f32 to vector<8x8xf32>
      %118 = arith.mulf %116, %117 : vector<8x8xf32>
      %119 = arith.addf %118, %17 : vector<8x8xf32>
      %c0_62 = arith.constant 0 : index
      %c3 = arith.constant 3 : index
      %120 = vector.load %arg7[%c0_62, %c3] : memref<8x4xf32, #tpu.memory_space<vmem>>, vector<8x1xf32>
      %cst_63 = arith.constant dense<0xFF800000> : vector<8xf32>
      %121 = vector.multi_reduction <maximumf>, %119, %cst_63 [1] : vector<8x8xf32> to vector<8xf32>
      %122 = vector.shape_cast %121 : vector<8xf32> to vector<8x1xf32>
      %123 = arith.maximumf %120, %122 : vector<8x1xf32>
      %124 = arith.subf %120, %123 : vector<8x1xf32>
      %125 = math.exp %124 : vector<8x1xf32>
      %126 = vector.broadcast %123 : vector<8x1xf32> to vector<8x8xf32>
      %127 = arith.subf %119, %126 : vector<8x8xf32>
      %128 = math.exp %127 : vector<8x8xf32>
      %c0_64 = arith.constant 0 : index
      %c3_65 = arith.constant 3 : index
      %129 = vector.load %arg8[%c0_64, %c3_65] : memref<8x4xf32, #tpu.memory_space<vmem>>, vector<8x1xf32>
      %130 = arith.mulf %125, %129 : vector<8x1xf32>
      %cst_66 = arith.constant dense<0.000000e+00> : vector<8xf32>
      %131 = vector.multi_reduction <add>, %128, %cst_66 [1] : vector<8x8xf32> to vector<8xf32>
      %132 = vector.shape_cast %131 : vector<8xf32> to vector<8x1xf32>
      %133 = arith.addf %130, %132 : vector<8x1xf32>
      %c0_67 = arith.constant 0 : index
      %c3_68 = arith.constant 3 : index
      %134 = vector.load %arg8[%c0_67, %c3_68] : memref<8x4xf32, #tpu.memory_space<vmem>>, vector<8x1xf32>
      tpu.vector_store %arg8[%c0_67, %c3_68], %133 {strides = array<i32>} : memref<8x4xf32, #tpu.memory_space<vmem>>, vector<8x1xf32>,
      %c0_69 = arith.constant 0 : index
      %c24 = arith.constant 24 : index
      %135 = vector.load %arg9[%c0_69, %c24] : memref<8x32xf32, #tpu.memory_space<vmem>>, vector<8x8xf32>
      %136 = vector.broadcast %125 : vector<8x1xf32> to vector<8x8xf32>
      %137 = arith.mulf %136, %135 : vector<8x8xf32>
      %138 = arith.truncf %128 : vector<8x8xf32> to vector<8x8xbf16>
      %139 = vector.extract_strided_slice %23 {offsets = [0, 24], sizes = [8, 8], strides = [1, 1]} : vector<8x32xbf16> to vector<8x8xbf16>
      %cst_70 = arith.constant dense<0.000000e+00> : vector<8x8xf32>
      %140 = tpu.matmul %138, %139, %cst_70 {dimension_numbers = #tpu.dot_dimension_numbers<[1], [0], [0], [1], [0, 0, 1, 1], [], []>} : vector<8x8xbf16>, vector<8x8xbf16>, vector<8x8xf32> -> vector<8x8xf32>
      %141 = arith.addf %137, %140 : vector<8x8xf32>
      %c0_71 = arith.constant 0 : index
      %c24_72 = arith.constant 24 : index
      %142 = vector.load %arg9[%c0_71, %c24_72] : memref<8x32xf32, #tpu.memory_space<vmem>>, vector<8x8xf32>
      tpu.vector_store %arg9[%c0_71, %c24_72], %141 {strides = array<i32>} : memref<8x32xf32, #tpu.memory_space<vmem>>, vector<8x8xf32>,
      %c0_73 = arith.constant 0 : index
      %c3_74 = arith.constant 3 : index
      %143 = vector.load %arg7[%c0_73, %c3_74] : memref<8x4xf32, #tpu.memory_space<vmem>>, vector<8x1xf32>
      tpu.vector_store %arg7[%c0_73, %c3_74], %123 {strides = array<i32>} : memref<8x4xf32, #tpu.memory_space<vmem>>, vector<8x1xf32>,
    } else {
    }
    %c0_i32_2 = arith.constant 0 : i32
    %6 = arith.cmpi eq, %arg2, %c0_i32_2 : i32
    %7 = arith.extui %6 : i1 to i32
    %c0_i32_3 = arith.constant 0 : i32
    %8 = arith.cmpi ne, %7, %c0_i32_3 : i32
    scf.if %8 {
      %c0 = arith.constant 0 : index
      %c0_4 = arith.constant 0 : index
      %9 = vector.load %arg8[%c0, %c0_4] : memref<8x4xf32, #tpu.memory_space<vmem>>, vector<8x4xf32>
      %10 = tpu.reciprocal %9 {approx = true} : vector<8x4xf32> -> vector<8x4xf32>
      %c0_5 = arith.constant 0 : index
      %c0_6 = arith.constant 0 : index
      %11 = vector.load %arg9[%c0_5, %c0_6] : memref<8x32xf32, #tpu.memory_space<vmem>>, vector<8x32xf32>
      %12 = vector.extract_strided_slice %11 {offsets = [0, 0], sizes = [8, 8], strides = [1, 1]} : vector<8x32xf32> to vector<8x8xf32>
      %13 = vector.extract_strided_slice %10 {offsets = [0, 0], sizes = [8, 1], strides = [1, 1]} : vector<8x4xf32> to vector<8x1xf32>
      %14 = vector.broadcast %13 : vector<8x1xf32> to vector<8x8xf32>
      %15 = arith.mulf %12, %14 : vector<8x8xf32>
      %16 = vector.extract_strided_slice %11 {offsets = [0, 8], sizes = [8, 8], strides = [1, 1]} : vector<8x32xf32> to vector<8x8xf32>
      %17 = vector.extract_strided_slice %10 {offsets = [0, 1], sizes = [8, 1], strides = [1, 1]} : vector<8x4xf32> to vector<8x1xf32>
      %18 = vector.broadcast %17 : vector<8x1xf32> to vector<8x8xf32>
      %19 = arith.mulf %16, %18 : vector<8x8xf32>
      %20 = vector.extract_strided_slice %11 {offsets = [0, 16], sizes = [8, 8], strides = [1, 1]} : vector<8x32xf32> to vector<8x8xf32>
      %21 = vector.extract_strided_slice %10 {offsets = [0, 2], sizes = [8, 1], strides = [1, 1]} : vector<8x4xf32> to vector<8x1xf32>
      %22 = vector.broadcast %21 : vector<8x1xf32> to vector<8x8xf32>
      %23 = arith.mulf %20, %22 : vector<8x8xf32>
      %24 = vector.extract_strided_slice %11 {offsets = [0, 24], sizes = [8, 8], strides = [1, 1]} : vector<8x32xf32> to vector<8x8xf32>
      %25 = vector.extract_strided_slice %10 {offsets = [0, 3], sizes = [8, 1], strides = [1, 1]} : vector<8x4xf32> to vector<8x1xf32>
      %26 = vector.broadcast %25 : vector<8x1xf32> to vector<8x8xf32>
      %27 = arith.mulf %24, %26 : vector<8x8xf32>
      %28 = tpu.concatenate %15, %19, %23, %27 in 1 : vector<8x8xf32>, vector<8x8xf32>, vector<8x8xf32>, vector<8x8xf32> -> vector<8x32xf32>
      %29 = arith.truncf %28 : vector<8x32xf32> to vector<8x32xbf16>
      %c0_7 = arith.constant 0 : index
      %c0_8 = arith.constant 0 : index
      %c0_9 = arith.constant 0 : index
      %30 = vector.load %arg6[%c0_7, %c0_8, %c0_9] : memref<1x8x32xbf16, #tpu.memory_space<vmem>>, vector<1x8x32xbf16>
      %31 = vector.shape_cast %30 : vector<1x8x32xbf16> to vector<8x32xbf16>
      %32 = vector.shape_cast %29 : vector<8x32xbf16> to vector<1x8x32xbf16>
      tpu.vector_store %arg6[%c0_7, %c0_8, %c0_9], %32 {strides = array<i32>} : memref<1x8x32xbf16, #tpu.memory_space<vmem>>, vector<1x8x32xbf16>,
    } else {
    }
    return
  }
  func.func @transform_0(%arg0: i32, %arg1: i32, %arg2: i32) -> (i32, i32, i32) {
    %c0_i32 = arith.constant 0 : i32
    %c0_i32_0 = arith.constant 0 : i32
    return %arg0, %arg1, %c0_i32 : i32, i32, i32
  }
  func.func @transform_1(%arg0: i32, %arg1: i32, %arg2: i32) -> (i32, i32, i32) {
    %0 = arith.minsi %arg2, %arg1 : i32
    %c0_i32 = arith.constant 0 : i32
    %c0_i32_0 = arith.constant 0 : i32
    return %arg0, %0, %c0_i32 : i32, i32, i32
  }
  func.func @transform_2(%arg0: i32, %arg1: i32, %arg2: i32) -> (i32, i32, i32) {
    %0 = arith.minsi %arg2, %arg1 : i32
    %c0_i32 = arith.constant 0 : i32
    %c0_i32_0 = arith.constant 0 : i32
    return %arg0, %0, %c0_i32 : i32, i32, i32
  }
  func.func @transform_3(%arg0: i32, %arg1: i32, %arg2: i32) -> (i32, i32, i32) {
    %c0_i32 = arith.constant 0 : i32
    %c0_i32_0 = arith.constant 0 : i32
    return %arg0, %arg1, %c0_i32 : i32, i32, i32
  }
}

module attributes {stable_mosaic.version = 11 : i64} {
  func.func @_linear_kernel(%arg0: i32, %arg1: i32, %arg2: i32, %arg3: memref<16x32xbf16, #tpu.memory_space<vmem>>, %arg4: memref<32x128xbf16, #tpu.memory_space<vmem>>, %arg5: memref<1x32xbf16, #tpu.memory_space<vmem>>, %arg6: memref<1x32xbf16, #tpu.memory_space<vmem>>, %arg7: memref<1x128xbf16, #tpu.memory_space<vmem>>, %arg8: memref<16x128xbf16, #tpu.memory_space<vmem>>) attributes {dimension_semantics = [#tpu.dimension_semantics<parallel>, #tpu.dimension_semantics<parallel>, #tpu.dimension_semantics<arbitrary>], iteration_bounds = array<i64: 1, 1, 1>, scalar_prefetch = 0 : i64, scratch_operands = 0 : i64, tpu.core_type = #tpu.core_type<tc>, window_params = [{transform_indices = @transform_0, window_bounds = array<i64: 16, 32>}, {transform_indices = @transform_1, window_bounds = array<i64: 32, 128>}, {pipeline_mode = #tpu.pipeline_mode<synchronous>, transform_indices = @transform_2, window_bounds = array<i64: 1, 32>}, {pipeline_mode = #tpu.pipeline_mode<synchronous>, transform_indices = @transform_3, window_bounds = array<i64: 1, 32>}, {transform_indices = @transform_4, window_bounds = array<i64: 1, 128>}, {transform_indices = @transform_5, window_bounds = array<i64: 16, 128>}]} {
    %c0 = arith.constant 0 : index
    %c0_0 = arith.constant 0 : index
    %0 = vector.load %arg3[%c0, %c0_0] : memref<16x32xbf16, #tpu.memory_space<vmem>>, vector<16x32xbf16>
    %1 = arith.extf %0 : vector<16x32xbf16> to vector<16x32xf32>
    %cst = arith.constant dense<0.000000e+00> : vector<16xf32>
    %2 = vector.multi_reduction <add>, %1, %cst [1] : vector<16x32xf32> to vector<16xf32>
    %3 = vector.shape_cast %2 : vector<16xf32> to vector<16x1xf32>
    %cst_1 = arith.constant 3.200000e+01 : f32
    %4 = vector.broadcast %cst_1 : f32 to vector<16x1xf32>
    %5 = arith.divf %3, %4 : vector<16x1xf32>
    %6 = vector.broadcast %5 : vector<16x1xf32> to vector<16x32xf32>
    %7 = arith.subf %1, %6 : vector<16x32xf32>
    %8 = arith.mulf %7, %7 : vector<16x32xf32>
    %cst_2 = arith.constant dense<0.000000e+00> : vector<16xf32>
    %9 = vector.multi_reduction <add>, %8, %cst_2 [1] : vector<16x32xf32> to vector<16xf32>
    %10 = vector.shape_cast %9 : vector<16xf32> to vector<16x1xf32>
    %cst_3 = arith.constant 3.200000e+01 : f32
    %11 = vector.broadcast %cst_3 : f32 to vector<16x1xf32>
    %12 = arith.divf %10, %11 : vector<16x1xf32>
    %cst_4 = arith.constant 9.99999974E-6 : f32
    %13 = vector.broadcast %cst_4 : f32 to vector<16x1xf32>
    %14 = arith.addf %12, %13 : vector<16x1xf32>
    %15 = math.rsqrt %14 : vector<16x1xf32>
    %16 = vector.broadcast %15 : vector<16x1xf32> to vector<16x32xf32>
    %17 = arith.mulf %7, %16 : vector<16x32xf32>
    %c0_5 = arith.constant 0 : index
    %c0_6 = arith.constant 0 : index
    %18 = vector.load %arg5[%c0_5, %c0_6] : memref<1x32xbf16, #tpu.memory_space<vmem>>, vector<1x32xbf16>
    %19 = arith.extf %18 : vector<1x32xbf16> to vector<1x32xf32>
    %20 = vector.broadcast %19 : vector<1x32xf32> to vector<16x32xf32>
    %21 = arith.mulf %17, %20 : vector<16x32xf32>
    %c0_7 = arith.constant 0 : index
    %c0_8 = arith.constant 0 : index
    %22 = vector.load %arg6[%c0_7, %c0_8] : memref<1x32xbf16, #tpu.memory_space<vmem>>, vector<1x32xbf16>
    %23 = arith.extf %22 : vector<1x32xbf16> to vector<1x32xf32>
    %24 = vector.broadcast %23 : vector<1x32xf32> to vector<16x32xf32>
    %25 = arith.addf %21, %24 : vector<16x32xf32>
    %26 = arith.truncf %25 : vector<16x32xf32> to vector<16x32xbf16>
    %c0_9 = arith.constant 0 : index
    %c0_10 = arith.constant 0 : index
    %27 = vector.load %arg4[%c0_9, %c0_10] : memref<32x128xbf16, #tpu.memory_space<vmem>>, vector<32x128xbf16>
    %cst_11 = arith.constant dense<0.000000e+00> : vector<16x128xf32>
    %28 = tpu.matmul %26, %27, %cst_11 {dimension_numbers = #tpu.dot_dimension_numbers<[1], [0], [0], [1], [0, 0, 1, 1], [], []>} : vector<16x32xbf16>, vector<32x128xbf16>, vector<16x128xf32> -> vector<16x128xf32>
    %c0_12 = arith.constant 0 : index
    %c0_13 = arith.constant 0 : index
    %29 = vector.load %arg7[%c0_12, %c0_13] : memref<1x128xbf16, #tpu.memory_space<vmem>>, vector<1x128xbf16>
    %30 = arith.extf %29 : vector<1x128xbf16> to vector<1x128xf32>
    %31 = vector.broadcast %30 : vector<1x128xf32> to vector<16x128xf32>
    %32 = arith.addf %28, %31 : vector<16x128xf32>
    %cst_14 = arith.constant 5.000000e-01 : f32
    %33 = vector.broadcast %cst_14 : f32 to vector<16x128xf32>
    %34 = arith.mulf %33, %32 : vector<16x128xf32>
    %cst_15 = arith.constant 0.707106769 : f32
    %35 = vector.broadcast %cst_15 : f32 to vector<16x128xf32>
    %36 = arith.mulf %32, %35 : vector<16x128xf32>
    %37 = math.erf %36 : vector<16x128xf32>
    %cst_16 = arith.constant 1.000000e+00 : f32
    %38 = vector.broadcast %cst_16 : f32 to vector<16x128xf32>
    %39 = arith.addf %38, %37 : vector<16x128xf32>
    %40 = arith.mulf %34, %39 : vector<16x128xf32>
    %41 = arith.truncf %40 : vector<16x128xf32> to vector<16x128xbf16>
    %c0_17 = arith.constant 0 : index
    %c0_18 = arith.constant 0 : index
    %42 = vector.load %arg8[%c0_17, %c0_18] : memref<16x128xbf16, #tpu.memory_space<vmem>>, vector<16x128xbf16>
    tpu.vector_store %arg8[%c0_17, %c0_18], %41 {strides = array<i32>} : memref<16x128xbf16, #tpu.memory_space<vmem>>, vector<16x128xbf16>,
    return
  }
  func.func @transform_0(%arg0: i32, %arg1: i32, %arg2: i32) -> (i32, i32) {
    %c0_i32 = arith.constant 0 : i32
    return %arg0, %arg2 : i32, i32
  }
  func.func @transform_1(%arg0: i32, %arg1: i32, %arg2: i32) -> (i32, i32) {
    %c0_i32 = arith.constant 0 : i32
    return %arg2, %arg1 : i32, i32
  }
  func.func @transform_2(%arg0: i32, %arg1: i32, %arg2: i32) -> (i32, i32) {
    %c0_i32 = arith.constant 0 : i32
    %c0_i32_0 = arith.constant 0 : i32
    %c0_i32_1 = arith.constant 0 : i32
    return %c0_i32, %c0_i32_0 : i32, i32
  }
  func.func @transform_3(%arg0: i32, %arg1: i32, %arg2: i32) -> (i32, i32) {
    %c0_i32 = arith.constant 0 : i32
    %c0_i32_0 = arith.constant 0 : i32
    %c0_i32_1 = arith.constant 0 : i32
    return %c0_i32, %c0_i32_0 : i32, i32
  }
  func.func @transform_4(%arg0: i32, %arg1: i32, %arg2: i32) -> (i32, i32) {
    %c0_i32 = arith.constant 0 : i32
    %c0_i32_0 = arith.constant 0 : i32
    return %c0_i32, %arg1 : i32, i32
  }
  func.func @transform_5(%arg0: i32, %arg1: i32, %arg2: i32) -> (i32, i32) {
    %c0_i32 = arith.constant 0 : i32
    return %arg0, %arg1 : i32, i32
  }
}

module attributes {stable_mosaic.version = 11 : i64} {
  func.func @_linear_kernel(%arg0: i32, %arg1: i32, %arg2: i32, %arg3: memref<16x32xbf16, #tpu.memory_space<vmem>>, %arg4: memref<32x32xbf16, #tpu.memory_space<vmem>>, %arg5: memref<1x32xbf16, #tpu.memory_space<vmem>>, %arg6: memref<16x32xbf16, #tpu.memory_space<vmem>>, %arg7: memref<16x32xbf16, #tpu.memory_space<vmem>>) attributes {dimension_semantics = [#tpu.dimension_semantics<parallel>, #tpu.dimension_semantics<parallel>, #tpu.dimension_semantics<arbitrary>], iteration_bounds = array<i64: 1, 1, 1>, scalar_prefetch = 0 : i64, scratch_operands = 0 : i64, tpu.core_type = #tpu.core_type<tc>, window_params = [{transform_indices = @transform_0, window_bounds = array<i64: 16, 32>}, {transform_indices = @transform_1, window_bounds = array<i64: 32, 32>}, {transform_indices = @transform_2, window_bounds = array<i64: 1, 32>}, {transform_indices = @transform_3, window_bounds = array<i64: 16, 32>}, {transform_indices = @transform_4, window_bounds = array<i64: 16, 32>}]} {
    %c0 = arith.constant 0 : index
    %c0_0 = arith.constant 0 : index
    %0 = vector.load %arg3[%c0, %c0_0] : memref<16x32xbf16, #tpu.memory_space<vmem>>, vector<16x32xbf16>
    %c0_1 = arith.constant 0 : index
    %c0_2 = arith.constant 0 : index
    %1 = vector.load %arg4[%c0_1, %c0_2] : memref<32x32xbf16, #tpu.memory_space<vmem>>, vector<32x32xbf16>
    %cst = arith.constant dense<0.000000e+00> : vector<16x32xf32>
    %2 = tpu.matmul %0, %1, %cst {dimension_numbers = #tpu.dot_dimension_numbers<[1], [0], [0], [1], [0, 0, 1, 1], [], []>} : vector<16x32xbf16>, vector<32x32xbf16>, vector<16x32xf32> -> vector<16x32xf32>
    %c0_3 = arith.constant 0 : index
    %c0_4 = arith.constant 0 : index
    %3 = vector.load %arg5[%c0_3, %c0_4] : memref<1x32xbf16, #tpu.memory_space<vmem>>, vector<1x32xbf16>
    %4 = arith.extf %3 : vector<1x32xbf16> to vector<1x32xf32>
    %5 = vector.broadcast %4 : vector<1x32xf32> to vector<16x32xf32>
    %6 = arith.addf %2, %5 : vector<16x32xf32>
    %c0_5 = arith.constant 0 : index
    %c0_6 = arith.constant 0 : index
    %7 = vector.load %arg6[%c0_5, %c0_6] : memref<16x32xbf16, #tpu.memory_space<vmem>>, vector<16x32xbf16>
    %8 = arith.extf %7 : vector<16x32xbf16> to vector<16x32xf32>
    %9 = arith.addf %6, %8 : vector<16x32xf32>
    %10 = arith.truncf %9 : vector<16x32xf32> to vector<16x32xbf16>
    %c0_7 = arith.constant 0 : index
    %c0_8 = arith.constant 0 : index
    %11 = vector.load %arg7[%c0_7, %c0_8] : memref<16x32xbf16, #tpu.memory_space<vmem>>, vector<16x32xbf16>
    tpu.vector_store %arg7[%c0_7, %c0_8], %10 {strides = array<i32>} : memref<16x32xbf16, #tpu.memory_space<vmem>>, vector<16x32xbf16>,
    return
  }
  func.func @transform_0(%arg0: i32, %arg1: i32, %arg2: i32) -> (i32, i32) {
    %c0_i32 = arith.constant 0 : i32
    return %arg0, %arg2 : i32, i32
  }
  func.func @transform_1(%arg0: i32, %arg1: i32, %arg2: i32) -> (i32, i32) {
    %c0_i32 = arith.constant 0 : i32
    return %arg2, %arg1 : i32, i32
  }
  func.func @transform_2(%arg0: i32, %arg1: i32, %arg2: i32) -> (i32, i32) {
    %c0_i32 = arith.constant 0 : i32
    %c0_i32_0 = arith.constant 0 : i32
    return %c0_i32, %arg1 : i32, i32
  }
  func.func @transform_3(%arg0: i32, %arg1: i32, %arg2: i32) -> (i32, i32) {
    %c0_i32 = arith.constant 0 : i32
    return %arg0, %arg1 : i32, i32
  }
  func.func @transform_4(%arg0: i32, %arg1: i32, %arg2: i32) -> (i32, i32) {
    %c0_i32 = arith.constant 0 : i32
    return %arg0, %arg1 : i32, i32
  }
}

module attributes {stable_mosaic.version = 11 : i64} {
  func.func @_linear_kernel(%arg0: i32, %arg1: i32, %arg2: i32, %arg3: memref<16x128xbf16, #tpu.memory_space<vmem>>, %arg4: memref<128x32xbf16, #tpu.memory_space<vmem>>, %arg5: memref<1x32xbf16, #tpu.memory_space<vmem>>, %arg6: memref<16x32xbf16, #tpu.memory_space<vmem>>, %arg7: memref<16x32xbf16, #tpu.memory_space<vmem>>) attributes {dimension_semantics = [#tpu.dimension_semantics<parallel>, #tpu.dimension_semantics<parallel>, #tpu.dimension_semantics<arbitrary>], iteration_bounds = array<i64: 1, 1, 1>, scalar_prefetch = 0 : i64, scratch_operands = 0 : i64, tpu.core_type = #tpu.core_type<tc>, window_params = [{transform_indices = @transform_0, window_bounds = array<i64: 16, 128>}, {transform_indices = @transform_1, window_bounds = array<i64: 128, 32>}, {transform_indices = @transform_2, window_bounds = array<i64: 1, 32>}, {transform_indices = @transform_3, window_bounds = array<i64: 16, 32>}, {transform_indices = @transform_4, window_bounds = array<i64: 16, 32>}]} {
    %c0 = arith.constant 0 : index
    %c0_0 = arith.constant 0 : index
    %0 = vector.load %arg3[%c0, %c0_0] : memref<16x128xbf16, #tpu.memory_space<vmem>>, vector<16x128xbf16>
    %c0_1 = arith.constant 0 : index
    %c0_2 = arith.constant 0 : index
    %1 = vector.load %arg4[%c0_1, %c0_2] : memref<128x32xbf16, #tpu.memory_space<vmem>>, vector<128x32xbf16>
    %cst = arith.constant dense<0.000000e+00> : vector<16x32xf32>
    %2 = tpu.matmul %0, %1, %cst {dimension_numbers = #tpu.dot_dimension_numbers<[1], [0], [0], [1], [0, 0, 1, 1], [], []>} : vector<16x128xbf16>, vector<128x32xbf16>, vector<16x32xf32> -> vector<16x32xf32>
    %c0_3 = arith.constant 0 : index
    %c0_4 = arith.constant 0 : index
    %3 = vector.load %arg5[%c0_3, %c0_4] : memref<1x32xbf16, #tpu.memory_space<vmem>>, vector<1x32xbf16>
    %4 = arith.extf %3 : vector<1x32xbf16> to vector<1x32xf32>
    %5 = vector.broadcast %4 : vector<1x32xf32> to vector<16x32xf32>
    %6 = arith.addf %2, %5 : vector<16x32xf32>
    %c0_5 = arith.constant 0 : index
    %c0_6 = arith.constant 0 : index
    %7 = vector.load %arg6[%c0_5, %c0_6] : memref<16x32xbf16, #tpu.memory_space<vmem>>, vector<16x32xbf16>
    %8 = arith.extf %7 : vector<16x32xbf16> to vector<16x32xf32>
    %9 = arith.addf %6, %8 : vector<16x32xf32>
    %10 = arith.truncf %9 : vector<16x32xf32> to vector<16x32xbf16>
    %c0_7 = arith.constant 0 : index
    %c0_8 = arith.constant 0 : index
    %11 = vector.load %arg7[%c0_7, %c0_8] : memref<16x32xbf16, #tpu.memory_space<vmem>>, vector<16x32xbf16>
    tpu.vector_store %arg7[%c0_7, %c0_8], %10 {strides = array<i32>} : memref<16x32xbf16, #tpu.memory_space<vmem>>, vector<16x32xbf16>,
    return
  }
  func.func @transform_0(%arg0: i32, %arg1: i32, %arg2: i32) -> (i32, i32) {
    %c0_i32 = arith.constant 0 : i32
    return %arg0, %arg2 : i32, i32
  }
  func.func @transform_1(%arg0: i32, %arg1: i32, %arg2: i32) -> (i32, i32) {
    %c0_i32 = arith.constant 0 : i32
    return %arg2, %arg1 : i32, i32
  }
  func.func @transform_2(%arg0: i32, %arg1: i32, %arg2: i32) -> (i32, i32) {
    %c0_i32 = arith.constant 0 : i32
    %c0_i32_0 = arith.constant 0 : i32
    return %c0_i32, %arg1 : i32, i32
  }
  func.func @transform_3(%arg0: i32, %arg1: i32, %arg2: i32) -> (i32, i32) {
    %c0_i32 = arith.constant 0 : i32
    return %arg0, %arg1 : i32, i32
  }
  func.func @transform_4(%arg0: i32, %arg1: i32, %arg2: i32) -> (i32, i32) {
    %c0_i32 = arith.constant 0 : i32
    return %arg0, %arg1 : i32, i32
  }
}

module attributes {stable_mosaic.version = 11 : i64} {
  func.func @_linear_kernel(%arg0: i32, %arg1: i32, %arg2: i32, %arg3: memref<2x32xbf16, #tpu.memory_space<vmem>>, %arg4: memref<64x32xbf16, #tpu.memory_space<vmem>>, %arg5: memref<1x32xbf16, #tpu.memory_space<vmem>>, %arg6: memref<1x32xbf16, #tpu.memory_space<vmem>>, %arg7: memref<2x64xf32, #tpu.memory_space<vmem>>) attributes {dimension_semantics = [#tpu.dimension_semantics<parallel>, #tpu.dimension_semantics<parallel>, #tpu.dimension_semantics<arbitrary>], iteration_bounds = array<i64: 1, 1, 1>, scalar_prefetch = 0 : i64, scratch_operands = 0 : i64, tpu.core_type = #tpu.core_type<tc>, window_params = [{transform_indices = @transform_0, window_bounds = array<i64: 2, 32>}, {transform_indices = @transform_1, window_bounds = array<i64: 64, 32>}, {pipeline_mode = #tpu.pipeline_mode<synchronous>, transform_indices = @transform_2, window_bounds = array<i64: 1, 32>}, {pipeline_mode = #tpu.pipeline_mode<synchronous>, transform_indices = @transform_3, window_bounds = array<i64: 1, 32>}, {transform_indices = @transform_4, window_bounds = array<i64: 2, 64>}]} {
    %c0 = arith.constant 0 : index
    %c0_0 = arith.constant 0 : index
    %0 = vector.load %arg3[%c0, %c0_0] : memref<2x32xbf16, #tpu.memory_space<vmem>>, vector<2x32xbf16>
    %1 = arith.extf %0 : vector<2x32xbf16> to vector<2x32xf32>
    %cst = arith.constant dense<0.000000e+00> : vector<2xf32>
    %2 = vector.multi_reduction <add>, %1, %cst [1] : vector<2x32xf32> to vector<2xf32>
    %3 = vector.shape_cast %2 : vector<2xf32> to vector<2x1xf32>
    %cst_1 = arith.constant 3.200000e+01 : f32
    %4 = vector.broadcast %cst_1 : f32 to vector<2x1xf32>
    %5 = arith.divf %3, %4 : vector<2x1xf32>
    %6 = vector.broadcast %5 : vector<2x1xf32> to vector<2x32xf32>
    %7 = arith.subf %1, %6 : vector<2x32xf32>
    %8 = arith.mulf %7, %7 : vector<2x32xf32>
    %cst_2 = arith.constant dense<0.000000e+00> : vector<2xf32>
    %9 = vector.multi_reduction <add>, %8, %cst_2 [1] : vector<2x32xf32> to vector<2xf32>
    %10 = vector.shape_cast %9 : vector<2xf32> to vector<2x1xf32>
    %cst_3 = arith.constant 3.200000e+01 : f32
    %11 = vector.broadcast %cst_3 : f32 to vector<2x1xf32>
    %12 = arith.divf %10, %11 : vector<2x1xf32>
    %cst_4 = arith.constant 9.99999974E-6 : f32
    %13 = vector.broadcast %cst_4 : f32 to vector<2x1xf32>
    %14 = arith.addf %12, %13 : vector<2x1xf32>
    %15 = math.rsqrt %14 : vector<2x1xf32>
    %16 = vector.broadcast %15 : vector<2x1xf32> to vector<2x32xf32>
    %17 = arith.mulf %7, %16 : vector<2x32xf32>
    %c0_5 = arith.constant 0 : index
    %c0_6 = arith.constant 0 : index
    %18 = vector.load %arg5[%c0_5, %c0_6] : memref<1x32xbf16, #tpu.memory_space<vmem>>, vector<1x32xbf16>
    %19 = arith.extf %18 : vector<1x32xbf16> to vector<1x32xf32>
    %20 = vector.broadcast %19 : vector<1x32xf32> to vector<2x32xf32>
    %21 = arith.mulf %17, %20 : vector<2x32xf32>
    %c0_7 = arith.constant 0 : index
    %c0_8 = arith.constant 0 : index
    %22 = vector.load %arg6[%c0_7, %c0_8] : memref<1x32xbf16, #tpu.memory_space<vmem>>, vector<1x32xbf16>
    %23 = arith.extf %22 : vector<1x32xbf16> to vector<1x32xf32>
    %24 = vector.broadcast %23 : vector<1x32xf32> to vector<2x32xf32>
    %25 = arith.addf %21, %24 : vector<2x32xf32>
    %26 = arith.truncf %25 : vector<2x32xf32> to vector<2x32xbf16>
    %c0_9 = arith.constant 0 : index
    %c0_10 = arith.constant 0 : index
    %27 = vector.load %arg4[%c0_9, %c0_10] : memref<64x32xbf16, #tpu.memory_space<vmem>>, vector<64x32xbf16>
    %cst_11 = arith.constant dense<0.000000e+00> : vector<2x64xf32>
    %28 = tpu.matmul %26, %27, %cst_11 {dimension_numbers = #tpu.dot_dimension_numbers<[1], [1], [0], [0], [0, 0, 1, 0], [], []>} : vector<2x32xbf16>, vector<64x32xbf16>, vector<2x64xf32> -> vector<2x64xf32>
    %c0_12 = arith.constant 0 : index
    %c0_13 = arith.constant 0 : index
    %29 = vector.load %arg7[%c0_12, %c0_13] : memref<2x64xf32, #tpu.memory_space<vmem>>, vector<2x64xf32>
    tpu.vector_store %arg7[%c0_12, %c0_13], %28 {strides = array<i32>} : memref<2x64xf32, #tpu.memory_space<vmem>>, vector<2x64xf32>,
    return
  }
  func.func @transform_0(%arg0: i32, %arg1: i32, %arg2: i32) -> (i32, i32) {
    %c0_i32 = arith.constant 0 : i32
    return %arg0, %arg2 : i32, i32
  }
  func.func @transform_1(%arg0: i32, %arg1: i32, %arg2: i32) -> (i32, i32) {
    %c0_i32 = arith.constant 0 : i32
    return %arg1, %arg2 : i32, i32
  }
  func.func @transform_2(%arg0: i32, %arg1: i32, %arg2: i32) -> (i32, i32) {
    %c0_i32 = arith.constant 0 : i32
    %c0_i32_0 = arith.constant 0 : i32
    %c0_i32_1 = arith.constant 0 : i32
    return %c0_i32, %c0_i32_0 : i32, i32
  }
  func.func @transform_3(%arg0: i32, %arg1: i32, %arg2: i32) -> (i32, i32) {
    %c0_i32 = arith.constant 0 : i32
    %c0_i32_0 = arith.constant 0 : i32
    %c0_i32_1 = arith.constant 0 : i32
    return %c0_i32, %c0_i32_0 : i32, i32
  }
  func.func @transform_4(%arg0: i32, %arg1: i32, %arg2: i32) -> (i32, i32) {
    %c0_i32 = arith.constant 0 : i32
    return %arg0, %arg1 : i32, i32
  }
}

</mosaic_0001>

<llo_original>
// kernel: _lambda_.11
$region0: #{_lambda_.11}
  #allocation0 [shape = 'u32[]', space=smem, size = 0x4, offset = 0x4, fixed_abs, tag = 'smem constant byte address 0x4 - core index']
  #allocation1 [shape = 'u32[144,128]{1,0:T(1,128)}', space=vmem, size = 0x12000, scoped, tag = 'internal scratch']
  %s0 = inlined_call_operand.vmem [shape: bf16[16,32], index: 0, kind: input, shape index: {}]
  %s1 = inlined_call_operand.vmem [shape: bf16[32,96], index: 1, kind: input, shape index: {}]
  %s2 = inlined_call_operand.vmem [shape: bf16[1,32], index: 2, kind: input, shape index: {}]
  %s3 = inlined_call_operand.vmem [shape: bf16[1,32], index: 3, kind: input, shape index: {}]
  %s4 = inlined_call_operand.vmem [shape: bf16[1,96], index: 4, kind: input, shape index: {}]
  %s5 = inlined_call_operand.vmem [shape: bf16[16,96], index: 5, kind: output, shape index: {}]
  %s6 = sld [smem:[#allocation0]]
  $region30: #{_lambda_.11} parent=0
    _
  %s8 = ssub.s32 1, %s6
  %s9 = scalar_select 0, %s8, %s6
  // Predicated region
  $region2: #{_lambda_.11} parent=0 // pred_check
    _
  $region3: #{_lambda_.11} parent=0 // pred_check_branch
    %11 = sbr.rel (0) target = $region5
  $region4: #{_lambda_.11} parent=0 // pred_region
    _
  $region5: #{_lambda_.11} parent=0 // pred_fallthru
    _
  // Predicated region
  $region6: #{_lambda_.11} parent=0 // pred_check
    _
  $region7: #{_lambda_.11} parent=0 // pred_check_branch
    %13 = sbr.rel (0) target = $region9
  $region8: #{_lambda_.11} parent=0 // pred_region
    _
  $region9: #{_lambda_.11} parent=0 // pred_fallthru
    _
  // Predicated region
  $region10: #{_lambda_.11} parent=0 // pred_check
    _
  $region11: #{_lambda_.11} parent=0 // pred_check_branch
    %15 = sbr.rel (0) target = $region13
  $region12: #{_lambda_.11} parent=0 // pred_region
    _
  $region13: #{_lambda_.11} parent=0 // pred_fallthru
    _
  // Predicated region
  $region14: #{_lambda_.11} parent=0 // pred_check
    _
  $region15: #{_lambda_.11} parent=0 // pred_check_branch
    %17 = sbr.rel (0) target = $region17
  $region16: #{_lambda_.11} parent=0 // pred_region
    _
  $region17: #{_lambda_.11} parent=0 // pred_fallthru
    _
  // Predicated region
  $region18: #{_lambda_.11} parent=0 // pred_check
    _
  $region19: #{_lambda_.11} parent=0 // pred_check_branch
    %19 = sbr.rel (0) target = $region21
  $region20: #{_lambda_.11} parent=0 // pred_region
    _
  $region21: #{_lambda_.11} parent=0 // pred_fallthru
    _
  %v21 = vld [vmem:[%s0] sm:$0xf]
  %v22 = vld [vmem:[%s0 + $0x4] sm:$0xf]
  %v23 = vunpack.c.l.bf16 %v21
  %v24 = vunpack.c.l.bf16 %v22
  %vm25 = vcmask 261120
  %v26 = vsel %vm25, %v23, 0.0
  %27 = vadd.xlane.f32.xlu0 %v26
  %v28 = vpop.xlane.xlu0 %27
  %v29 = vsel %vm25, %v24, 0.0
  %30 = vadd.xlane.f32.xlu0 %v29
  %v31 = vpop.xlane.xlu0 %30
  %v32 = vrcp.pop 32.0
  %v33 = vmul.f32 %v28, %v32
  %v34 = vmul.f32 %v31, %v32
  %v35 = vsub.f32 %v23, %v33
  %v36 = vsub.f32 %v24, %v34
  %v37 = vmul.f32 %v35, %v35
  %v38 = vmul.f32 %v36, %v36
  %v39 = vsel %vm25, %v37, 0.0
  %40 = vadd.xlane.f32.xlu0 %v39
  %v41 = vpop.xlane.xlu0 %40
  %v42 = vsel %vm25, %v38, 0.0
  %43 = vadd.xlane.f32.xlu0 %v42
  %v44 = vpop.xlane.xlu0 %43
  %v45 = vmul.f32 %v41, %v32
  %v46 = vmul.f32 %v44, %v32
  %v47 = vadd.f32 %v45, 1e-05
  %v48 = vadd.f32 %v46, 1e-05
  %v49 = vrsqrt.pop %v47
  %v50 = vrsqrt.pop %v48
  %v51 = vmul.f32 %v35, %v49
  %v52 = vmul.f32 %v36, %v50
  %v53 = vld [vmem:[%s2] sm:$0x1]
  %v54 = vunpack.c.l.bf16 %v53
  %v55 = vlaneseq
  %v56 = vshrl.u32 %v55, 7
  %v57 = vsub.s32 0, %v56
  %v58 = vrot.slane %v54, %v57
  %v59 = vmul.f32 %v51, %v58
  %v60 = vmul.f32 %v52, %v58
  %v61 = vld [vmem:[%s3] sm:$0x1]
  %v62 = vunpack.c.l.bf16 %v61
  %v63 = vlaneseq
  %v64 = vshrl.u32 %v63, 7
  %v65 = vsub.s32 0, %v64
  %v66 = vrot.slane %v62, %v65
  %v67 = vadd.f32 %v59, %v66
  %v68 = vadd.f32 %v60, %v66
  %v69 = vpack.c.bf16 %v68, %v67
  %v70 = vld [vmem:[%s1] sm:$0xf]
  %v71 = vld [vmem:[%s1 + $0x4] sm:$0xf]
  %v72 = vld [vmem:[%s1 + $0x8] sm:$0xf]
  %v73 = vld [vmem:[%s1 + $0xc] sm:$0xf]
  %v74 = vld [vmem:[%s4] sm:$0x1]
  %v75 = vunpack.c.l.bf16 %v74
  %v76 = vlaneseq
  %v77 = vshrl.u32 %v76, 7
  %v78 = vsub.s32 0, %v77
  %v79 = vrot.slane %v75, %v78
  %v84 = vunpack.c.l.b16 %v70
  %v85 = vunpack.c.l.b16 %v71
  %v86 = vunpack.c.l.b16 %v72
  %v87 = vunpack.c.l.b16 %v73
  %v88 = vpack.c.b16 %v85, %v84
  %v89 = vpack.c.b16 %v87, %v86
  %v93 = vsel %vm25, %v69, 0
  %95 = vmatprep.subr.bf16.mxu0 0
  %96 = vmatpush1.bf16.msra.mxu0 0
  %97 = vmatprep.subr.bf16.mxu0 0
  %98 = vmatpush1.bf16.msra.mxu0 0
  %99 = vmatprep.subr.bf16.mxu0 0
  %100 = vmatpush1.bf16.msra.mxu0 0
  %101 = vmatprep.subr.bf16.mxu0 0
  %102 = vmatpush1.bf16.msra.mxu0 0
  %103 = vmatprep.subr.bf16.mxu0 0
  %104 = vmatpush1.bf16.msra.mxu0 0
  %105 = vmatprep.subr.bf16.mxu0 0
  %106 = vmatpush1.bf16.msra.mxu0 0
  %107 = vmatprep.subr.bf16.mxu0 0
  %108 = vmatpush1.bf16.msra.mxu0 %v89
  %109 = vmatprep.subr.bf16.mxu0 0
  %110 = vmatpush1.bf16.msra.mxu0 %v88
  %111 = vmatprep.subr.bf16.mxu0 0
  %112 = vmatpush2.bf16.msra.mxu0 0
  %113 = vmatprep.subr.bf16.mxu0 0
  %114 = vmatpush2.bf16.msra.mxu0 0
  %115 = vmatprep.subr.bf16.mxu0 0
  %116 = vmatpush2.bf16.msra.mxu0 0
  %117 = vmatprep.subr.bf16.mxu0 0
  %118 = vmatpush2.bf16.msra.mxu0 0
  %119 = vmatprep.subr.bf16.mxu0 0
  %120 = vmatpush2.bf16.msra.mxu0 0
  %121 = vmatprep.subr.bf16.mxu0 0
  %122 = vmatpush2.bf16.msra.mxu0 0
  %123 = vmatprep.subr.bf16.mxu0 0
  %124 = vmatpush2.bf16.msra.mxu0 0
  %125 = vmatprep.subr.bf16.mxu0 0
  %126 = vmatpush2.bf16.msra.mxu0 0
  %127 = vmatprep.mubr.bf16.mxu0 0
  %128 = vmatmul.mubr.bf16.gmra.mxu0 %v93
  %v129 = vpop.f32.mrf.mxu0
  %v130 = vadd.f32 %v79, %v129
  %v131 = vpop.f32.mrf.mxu0
  %v132 = vpop.f32.mrf.mxu0
  %v133 = vadd.f32 %v79, %v132
  %v134 = vpop.f32.mrf.mxu0
  %135 = vdwg.mxu0
  %v136 = vpack.c.bf16 %v133, %v130
  %v138 = vunpack.c.l.b16 %v136
  %v139 = vunpack.c.h.b16 %v136
  %v140 = vpack.c.b16 %v138, %v138
  %v141 = vpack.c.b16 %v139, %v139
  %vm144 = vcmask 781312
  %145 = vst.msk [vmem:[%s5] sm:$0xf] %vm144, %v140
  %146 = vst.msk [vmem:[%s5 + $0x4] sm:$0xf] %vm144, %v141
  // Predicated region
  $region22: #{_lambda_.11} parent=0 // pred_check
    _
  $region23: #{_lambda_.11} parent=0 // pred_check_branch
    %148 = sbr.rel (0) target = $region25
  $region24: #{_lambda_.11} parent=0 // pred_region
    _
  $region25: #{_lambda_.11} parent=0 // pred_fallthru
    _
  // Predicated region
  $region26: #{_lambda_.11} parent=0 // pred_check
    _
  $region27: #{_lambda_.11} parent=0 // pred_check_branch
    %150 = sbr.rel (0) target = $region29
  $region28: #{_lambda_.11} parent=0 // pred_region
    _
  $region29: #{_lambda_.11} parent=0 // pred_fallthru
    _

// kernel: _lambda_.14
$region0: #{_lambda_.14}
  #allocation0 [shape = 'u32[]', space=smem, size = 0x4, offset = 0x4, fixed_abs, tag = 'smem constant byte address 0x4 - core index']
  #allocation1 [shape = 'u32[144,128]{1,0:T(1,128)}', space=vmem, size = 0x12000, scoped, tag = 'internal scratch']
  %s0 = inlined_call_operand.vmem [shape: bf16[16,32], index: 0, kind: input, shape index: {}]
  %s1 = inlined_call_operand.vmem [shape: bf16[32,128], index: 1, kind: input, shape index: {}]
  %s2 = inlined_call_operand.vmem [shape: bf16[1,32], index: 2, kind: input, shape index: {}]
  %s3 = inlined_call_operand.vmem [shape: bf16[1,32], index: 3, kind: input, shape index: {}]
  %s4 = inlined_call_operand.vmem [shape: bf16[1,128], index: 4, kind: input, shape index: {}]
  %s5 = inlined_call_operand.vmem [shape: bf16[16,128], index: 5, kind: output, shape index: {}]
  %s6 = sld [smem:[#allocation0]]
  $region30: #{_lambda_.14} parent=0
    _
  %s8 = ssub.s32 1, %s6
  %s9 = scalar_select 0, %s8, %s6
  // Predicated region
  $region2: #{_lambda_.14} parent=0 // pred_check
    _
  $region3: #{_lambda_.14} parent=0 // pred_check_branch
    %11 = sbr.rel (0) target = $region5
  $region4: #{_lambda_.14} parent=0 // pred_region
    _
  $region5: #{_lambda_.14} parent=0 // pred_fallthru
    _
  // Predicated region
  $region6: #{_lambda_.14} parent=0 // pred_check
    _
  $region7: #{_lambda_.14} parent=0 // pred_check_branch
    %13 = sbr.rel (0) target = $region9
  $region8: #{_lambda_.14} parent=0 // pred_region
    _
  $region9: #{_lambda_.14} parent=0 // pred_fallthru
    _
  // Predicated region
  $region10: #{_lambda_.14} parent=0 // pred_check
    _
  $region11: #{_lambda_.14} parent=0 // pred_check_branch
    %15 = sbr.rel (0) target = $region13
  $region12: #{_lambda_.14} parent=0 // pred_region
    _
  $region13: #{_lambda_.14} parent=0 // pred_fallthru
    _
  // Predicated region
  $region14: #{_lambda_.14} parent=0 // pred_check
    _
  $region15: #{_lambda_.14} parent=0 // pred_check_branch
    %17 = sbr.rel (0) target = $region17
  $region16: #{_lambda_.14} parent=0 // pred_region
    _
  $region17: #{_lambda_.14} parent=0 // pred_fallthru
    _
  // Predicated region
  $region18: #{_lambda_.14} parent=0 // pred_check
    _
  $region19: #{_lambda_.14} parent=0 // pred_check_branch
    %19 = sbr.rel (0) target = $region21
  $region20: #{_lambda_.14} parent=0 // pred_region
    _
  $region21: #{_lambda_.14} parent=0 // pred_fallthru
    _
  %v21 = vld [vmem:[%s0] sm:$0xf]
  %v22 = vld [vmem:[%s0 + $0x4] sm:$0xf]
  %v23 = vunpack.c.l.bf16 %v21
  %v24 = vunpack.c.l.bf16 %v22
  %vm25 = vcmask 261120
  %v26 = vsel %vm25, %v23, 0.0
  %27 = vadd.xlane.f32.xlu0 %v26
  %v28 = vpop.xlane.xlu0 %27
  %v29 = vsel %vm25, %v24, 0.0
  %30 = vadd.xlane.f32.xlu0 %v29
  %v31 = vpop.xlane.xlu0 %30
  %v32 = vrcp.pop 32.0
  %v33 = vmul.f32 %v28, %v32
  %v34 = vmul.f32 %v31, %v32
  %v35 = vsub.f32 %v23, %v33
  %v36 = vsub.f32 %v24, %v34
  %v37 = vmul.f32 %v35, %v35
  %v38 = vmul.f32 %v36, %v36
  %v39 = vsel %vm25, %v37, 0.0
  %40 = vadd.xlane.f32.xlu0 %v39
  %v41 = vpop.xlane.xlu0 %40
  %v42 = vsel %vm25, %v38, 0.0
  %43 = vadd.xlane.f32.xlu0 %v42
  %v44 = vpop.xlane.xlu0 %43
  %v45 = vmul.f32 %v41, %v32
  %v46 = vmul.f32 %v44, %v32
  %v47 = vadd.f32 %v45, 1e-05
  %v48 = vadd.f32 %v46, 1e-05
  %v49 = vrsqrt.pop %v47
  %v50 = vrsqrt.pop %v48
  %v51 = vmul.f32 %v35, %v49
  %v52 = vmul.f32 %v36, %v50
  %v53 = vld [vmem:[%s2] sm:$0x1]
  %v54 = vunpack.c.l.bf16 %v53
  %v55 = vlaneseq
  %v56 = vshrl.u32 %v55, 7
  %v57 = vsub.s32 0, %v56
  %v58 = vrot.slane %v54, %v57
  %v59 = vmul.f32 %v51, %v58
  %v60 = vmul.f32 %v52, %v58
  %v61 = vld [vmem:[%s3] sm:$0x1]
  %v62 = vunpack.c.l.bf16 %v61
  %v63 = vlaneseq
  %v64 = vshrl.u32 %v63, 7
  %v65 = vsub.s32 0, %v64
  %v66 = vrot.slane %v62, %v65
  %v67 = vadd.f32 %v59, %v66
  %v68 = vadd.f32 %v60, %v66
  %v69 = vpack.c.bf16 %v68, %v67
  %v70 = vld [vmem:[%s1] sm:$0xf]
  %v71 = vld [vmem:[%s1 + $0x4] sm:$0xf]
  %v72 = vld [vmem:[%s1 + $0x8] sm:$0xf]
  %v73 = vld [vmem:[%s1 + $0xc] sm:$0xf]
  %v74 = vld [vmem:[%s4] sm:$0x1]
  %v75 = vunpack.c.l.bf16 %v74
  %v76 = vlaneseq
  %v77 = vshrl.u32 %v76, 7
  %v78 = vsub.s32 0, %v77
  %v79 = vrot.slane %v75, %v78
  %v84 = vunpack.c.l.b16 %v70
  %v85 = vunpack.c.l.b16 %v71
  %v86 = vunpack.c.l.b16 %v72
  %v87 = vunpack.c.l.b16 %v73
  %v88 = vpack.c.b16 %v85, %v84
  %v89 = vpack.c.b16 %v87, %v86
  %v93 = vsel %vm25, %v69, 0
  %95 = vmatprep.subr.bf16.mxu0 0
  %96 = vmatpush1.bf16.msra.mxu0 0
  %97 = vmatprep.subr.bf16.mxu0 0
  %98 = vmatpush1.bf16.msra.mxu0 0
  %99 = vmatprep.subr.bf16.mxu0 0
  %100 = vmatpush1.bf16.msra.mxu0 0
  %101 = vmatprep.subr.bf16.mxu0 0
  %102 = vmatpush1.bf16.msra.mxu0 0
  %103 = vmatprep.subr.bf16.mxu0 0
  %104 = vmatpush1.bf16.msra.mxu0 0
  %105 = vmatprep.subr.bf16.mxu0 0
  %106 = vmatpush1.bf16.msra.mxu0 0
  %107 = vmatprep.subr.bf16.mxu0 0
  %108 = vmatpush1.bf16.msra.mxu0 %v89
  %109 = vmatprep.subr.bf16.mxu0 0
  %110 = vmatpush1.bf16.msra.mxu0 %v88
  %111 = vmatprep.subr.bf16.mxu0 0
  %112 = vmatpush2.bf16.msra.mxu0 0
  %113 = vmatprep.subr.bf16.mxu0 0
  %114 = vmatpush2.bf16.msra.mxu0 0
  %115 = vmatprep.subr.bf16.mxu0 0
  %116 = vmatpush2.bf16.msra.mxu0 0
  %117 = vmatprep.subr.bf16.mxu0 0
  %118 = vmatpush2.bf16.msra.mxu0 0
  %119 = vmatprep.subr.bf16.mxu0 0
  %120 = vmatpush2.bf16.msra.mxu0 0
  %121 = vmatprep.subr.bf16.mxu0 0
  %122 = vmatpush2.bf16.msra.mxu0 0
  %123 = vmatprep.subr.bf16.mxu0 0
  %124 = vmatpush2.bf16.msra.mxu0 0
  %125 = vmatprep.subr.bf16.mxu0 0
  %126 = vmatpush2.bf16.msra.mxu0 0
  %127 = vmatprep.mubr.bf16.mxu0 0
  %128 = vmatmul.mubr.bf16.gmra.mxu0 %v93
  %v129 = vpop.f32.mrf.mxu0
  %v130 = vadd.f32 %v79, %v129
  %v131 = vpop.f32.mrf.mxu0
  %v132 = vpop.f32.mrf.mxu0
  %v133 = vadd.f32 %v79, %v132
  %v134 = vpop.f32.mrf.mxu0
  %135 = vdwg.mxu0
  %v136 = vmul.f32 %v130, 0.5
  %v137 = vmul.f32 %v133, 0.5
  %v138 = vmul.f32 %v130, 0.70710677
  %v139 = vmul.f32 %v133, 0.70710677
  %v140 = verf.f32.pop %v138
  %v141 = verf.f32.pop %v139
  %v142 = vadd.f32 %v140, 1.0
  %v143 = vadd.f32 %v141, 1.0
  %v144 = vmul.f32 %v136, %v142
  %v145 = vmul.f32 %v137, %v143
  %v146 = vpack.c.bf16 %v145, %v144
  %v148 = vunpack.c.l.b16 %v146
  %v149 = vunpack.c.h.b16 %v146
  %v150 = vpack.c.b16 %v148, %v148
  %v151 = vpack.c.b16 %v149, %v149
  %154 = vst [vmem:[%s5] sm:$0xf] %v150
  %155 = vst [vmem:[%s5 + $0x4] sm:$0xf] %v151
  // Predicated region
  $region22: #{_lambda_.14} parent=0 // pred_check
    _
  $region23: #{_lambda_.14} parent=0 // pred_check_branch
    %157 = sbr.rel (0) target = $region25
  $region24: #{_lambda_.14} parent=0 // pred_region
    _
  $region25: #{_lambda_.14} parent=0 // pred_fallthru
    _
  // Predicated region
  $region26: #{_lambda_.14} parent=0 // pred_check
    _
  $region27: #{_lambda_.14} parent=0 // pred_check_branch
    %159 = sbr.rel (0) target = $region29
  $region28: #{_lambda_.14} parent=0 // pred_region
    _
  $region29: #{_lambda_.14} parent=0 // pred_fallthru
    _

// kernel: _lambda_.13
$region0: #{_lambda_.13}
  #allocation0 [shape = 'u32[]', space=smem, size = 0x4, offset = 0x4, fixed_abs, tag = 'smem constant byte address 0x4 - core index']
  #allocation1 [shape = 'u32[144,128]{1,0:T(1,128)}', space=vmem, size = 0x12000, scoped, tag = 'internal scratch']
  %s0 = inlined_call_operand.vmem [shape: bf16[16,32], index: 0, kind: input, shape index: {}]
  %s1 = inlined_call_operand.vmem [shape: bf16[32,32], index: 1, kind: input, shape index: {}]
  %s2 = inlined_call_operand.vmem [shape: bf16[1,32], index: 2, kind: input, shape index: {}]
  %s3 = inlined_call_operand.vmem [shape: bf16[16,32], index: 3, kind: input, shape index: {}]
  %s4 = inlined_call_operand.vmem [shape: bf16[16,32], index: 4, kind: output, shape index: {}]
  %s5 = sld [smem:[#allocation0]]
  $region26: #{_lambda_.13} parent=0
    _
  %s7 = ssub.s32 1, %s5
  %s8 = scalar_select 0, %s7, %s5
  // Predicated region
  $region2: #{_lambda_.13} parent=0 // pred_check
    _
  $region3: #{_lambda_.13} parent=0 // pred_check_branch
    %10 = sbr.rel (0) target = $region5
  $region4: #{_lambda_.13} parent=0 // pred_region
    _
  $region5: #{_lambda_.13} parent=0 // pred_fallthru
    _
  // Predicated region
  $region6: #{_lambda_.13} parent=0 // pred_check
    _
  $region7: #{_lambda_.13} parent=0 // pred_check_branch
    %12 = sbr.rel (0) target = $region9
  $region8: #{_lambda_.13} parent=0 // pred_region
    _
  $region9: #{_lambda_.13} parent=0 // pred_fallthru
    _
  // Predicated region
  $region10: #{_lambda_.13} parent=0 // pred_check
    _
  $region11: #{_lambda_.13} parent=0 // pred_check_branch
    %14 = sbr.rel (0) target = $region13
  $region12: #{_lambda_.13} parent=0 // pred_region
    _
  $region13: #{_lambda_.13} parent=0 // pred_fallthru
    _
  // Predicated region
  $region14: #{_lambda_.13} parent=0 // pred_check
    _
  $region15: #{_lambda_.13} parent=0 // pred_check_branch
    %16 = sbr.rel (0) target = $region17
  $region16: #{_lambda_.13} parent=0 // pred_region
    _
  $region17: #{_lambda_.13} parent=0 // pred_fallthru
    _
  %v18 = vld [vmem:[%s0] sm:$0xf]
  %v19 = vld [vmem:[%s0 + $0x4] sm:$0xf]
  %v20 = vld [vmem:[%s1] sm:$0xf]
  %v21 = vld [vmem:[%s1 + $0x4] sm:$0xf]
  %v22 = vld [vmem:[%s1 + $0x8] sm:$0xf]
  %v23 = vld [vmem:[%s1 + $0xc] sm:$0xf]
  %v24 = vld [vmem:[%s2] sm:$0x1]
  %v25 = vunpack.c.l.bf16 %v24
  %v26 = vlaneseq
  %v27 = vshrl.u32 %v26, 7
  %v28 = vsub.s32 0, %v27
  %v29 = vrot.slane %v25, %v28
  %v32 = vunpack.c.l.b16 %v18
  %v33 = vunpack.c.l.b16 %v19
  %v34 = vpack.c.b16 %v33, %v32
  %v39 = vunpack.c.l.b16 %v20
  %v40 = vunpack.c.l.b16 %v21
  %v41 = vunpack.c.l.b16 %v22
  %v42 = vunpack.c.l.b16 %v23
  %v43 = vpack.c.b16 %v40, %v39
  %v44 = vpack.c.b16 %v42, %v41
  %vm47 = vcmask 261120
  %v49 = vsel %vm47, %v34, 0
  %51 = vmatprep.subr.bf16.mxu0 0
  %52 = vmatpush1.bf16.msra.mxu0 0
  %53 = vmatprep.subr.bf16.mxu0 0
  %54 = vmatpush1.bf16.msra.mxu0 0
  %55 = vmatprep.subr.bf16.mxu0 0
  %56 = vmatpush1.bf16.msra.mxu0 0
  %57 = vmatprep.subr.bf16.mxu0 0
  %58 = vmatpush1.bf16.msra.mxu0 0
  %59 = vmatprep.subr.bf16.mxu0 0
  %60 = vmatpush1.bf16.msra.mxu0 0
  %61 = vmatprep.subr.bf16.mxu0 0
  %62 = vmatpush1.bf16.msra.mxu0 0
  %63 = vmatprep.subr.bf16.mxu0 0
  %64 = vmatpush1.bf16.msra.mxu0 %v44
  %65 = vmatprep.subr.bf16.mxu0 0
  %66 = vmatpush1.bf16.msra.mxu0 %v43
  %67 = vmatprep.subr.bf16.mxu0 0
  %68 = vmatpush2.bf16.msra.mxu0 0
  %69 = vmatprep.subr.bf16.mxu0 0
  %70 = vmatpush2.bf16.msra.mxu0 0
  %71 = vmatprep.subr.bf16.mxu0 0
  %72 = vmatpush2.bf16.msra.mxu0 0
  %73 = vmatprep.subr.bf16.mxu0 0
  %74 = vmatpush2.bf16.msra.mxu0 0
  %75 = vmatprep.subr.bf16.mxu0 0
  %76 = vmatpush2.bf16.msra.mxu0 0
  %77 = vmatprep.subr.bf16.mxu0 0
  %78 = vmatpush2.bf16.msra.mxu0 0
  %79 = vmatprep.subr.bf16.mxu0 0
  %80 = vmatpush2.bf16.msra.mxu0 0
  %81 = vmatprep.subr.bf16.mxu0 0
  %82 = vmatpush2.bf16.msra.mxu0 0
  %83 = vmatprep.mubr.bf16.mxu0 0
  %84 = vmatmul.mubr.bf16.gmra.mxu0 %v49
  %v85 = vpop.f32.mrf.mxu0
  %v86 = vadd.f32 %v29, %v85
  %v87 = vpop.f32.mrf.mxu0
  %v88 = vpop.f32.mrf.mxu0
  %v89 = vadd.f32 %v29, %v88
  %v90 = vpop.f32.mrf.mxu0
  %91 = vdwg.mxu0
  %v92 = vld [vmem:[%s3] sm:$0xf]
  %v93 = vld [vmem:[%s3 + $0x4] sm:$0xf]
  %v94 = vunpack.c.l.bf16 %v92
  %v95 = vunpack.c.l.bf16 %v93
  %v96 = vadd.f32 %v86, %v94
  %v97 = vadd.f32 %v89, %v95
  %v98 = vpack.c.bf16 %v97, %v96
  %v100 = vunpack.c.l.b16 %v98
  %v101 = vunpack.c.h.b16 %v98
  %v102 = vpack.c.b16 %v100, %v100
  %v103 = vpack.c.b16 %v101, %v101
  %vm106 = vcmask 257024
  %107 = vst.msk [vmem:[%s4] sm:$0xf] %vm106, %v102
  %108 = vst.msk [vmem:[%s4 + $0x4] sm:$0xf] %vm106, %v103
  // Predicated region
  $region18: #{_lambda_.13} parent=0 // pred_check
    _
  $region19: #{_lambda_.13} parent=0 // pred_check_branch
    %110 = sbr.rel (0) target = $region21
  $region20: #{_lambda_.13} parent=0 // pred_region
    _
  $region21: #{_lambda_.13} parent=0 // pred_fallthru
    _
  // Predicated region
  $region22: #{_lambda_.13} parent=0 // pred_check
    _
  $region23: #{_lambda_.13} parent=0 // pred_check_branch
    %112 = sbr.rel (0) target = $region25
  $region24: #{_lambda_.13} parent=0 // pred_region
    _
  $region25: #{_lambda_.13} parent=0 // pred_fallthru
    _

// kernel: _lambda_.12
$region0: #{_lambda_.12}
  #allocation0 [shape = 'u32[]', space=smem, size = 0x4, offset = 0x4, fixed_abs, tag = 'smem constant byte address 0x4 - core index']
  #allocation1 [shape = 'u32[144,128]{1,0:T(1,128)}', space=vmem, size = 0x12000, scoped, tag = 'internal scratch']
  #allocation2 [shape = 'f32[8,4]{1,0:T(8,128)}', space=vmem, size = 0x1000, scoped, tag = 'scratch operand']
  #allocation3 [shape = 'f32[8,4]{1,0:T(8,128)}', space=vmem, size = 0x1000, scoped, tag = 'scratch operand']
  #allocation4 [shape = 'f32[8,32]{1,0:T(8,128)}', space=vmem, size = 0x1000, scoped, tag = 'scratch operand']
  %s0 = inlined_call_operand.vmem [shape: bf16[2,8,32], index: 0, kind: input, shape index: {}]
  %s1 = inlined_call_operand.vmem [shape: bf16[2,8,32], index: 1, kind: input, shape index: {}]
  %s2 = inlined_call_operand.vmem [shape: bf16[2,8,32], index: 2, kind: input, shape index: {}]
  %s3 = inlined_call_operand.vmem [shape: bf16[2,8,32], index: 3, kind: output, shape index: {}]
  %s4 = sld [smem:[#allocation0]]
  $region57: #{_lambda_.12} parent=0
    _
  %s6 = ssub.s32 1, %s4
  %s7 = scalar_select 0, %s6, %s4
  loop: start=0, step=1, limit=4
  $region2: #{_lambda_.12} parent=0 // loop_pre_header
    _
  $region3: #{_lambda_.12} parent=0 // loop_header
    %s9 = sphi 0, %s13
    %p10 = scmp.ge.s32.totalorder %s9, 4
    %s16 = sphi 0, %s35
    %s17 = sphi 0, %s31
    %s18 = sphi 0, %s27
    %s19 = sphi 0, %s16
    %s20 = sphi 0, %s17
    %s21 = sphi 0, %s18
    %s22 = sphi 0, %s19
    %s23 = sphi 0, %s20
    %s24 = sphi 0, %s21
    %s40 = sphi 0, %s42
    %s43 = sphi 0, %s40
    %s44 = sphi 0, %s43
    %s60 = sphi 0, %s44
    %s72 = sphi 0, %s74
    %s75 = sphi 0, %s72
    %s76 = sphi 0, %s75
    %s92 = sphi 0, %s76
    %s104 = sphi 0, %s106
    %s107 = sphi 0, %s104
    %s108 = sphi 0, %s107
    %s124 = sphi 0, %s108
    %s132 = sphi 0, %s134
    %s135 = sphi 0, %s132
    %s136 = sphi 0, %s135
    %s152 = sphi 0, %s136
  $region4: #{_lambda_.12} parent=0 // loop_header_branch
    %12 = sbr.rel (%p10) target = $region8
  $region5: #{_lambda_.12} parent=0 // loop_body
    %s14 = ssub.s32 %s9, 1
    %s15 = ssub.s32 %s9, 2
    %s25 = sadd.s32 1, %s18
    %p26 = scmp.ge.s32.totalorder %s25, 1
    %s27 = scalar_select %p26, 0, %s25
    %s28 = sadd.s32 1, %s17
    %s29 = scalar_select %p26, %s28, %s17
    %p30 = scmp.ge.s32.totalorder %s29, 1
    %s31 = scalar_select %p30, 0, %s29
    %s32 = sadd.s32 1, %s16
    %s33 = scalar_select %p30, %s32, %s16
    %p34 = scmp.ge.s32.totalorder %s33, 2
    %s35 = scalar_select %p34, 0, %s33
    %s36 = ssub.s32 %s16, %s35
    %s37 = ssub.s32 %s17, %s31
    %s38 = sor.u32 %s36, %s37
    %p39 = scmp.eq.s32.totalorder %s38, 0
    %s41 = sadd.s32 %s40, 1
    %s42 = scalar_select %p39, %s40, %s41
    %p45 = pneg %p39
    %p46 = scmp.eq.s32.totalorder %s9, 1
    %p47 = por %p45, %p46
    %p48 = scmp.ne.s32.totalorder %s40, %s43
    %p49 = scmp.eq.s32.totalorder %s9, 0
    %p50 = por %p48, %p49
    %p51 = scmp.ne.s32.totalorder %s40, %s43
    %p52 = scmp.eq.s32.totalorder %s14, 1
    %p53 = por %p51, %p52
    %p54 = scmp.ne.s32.totalorder %s43, %s44
    %p55 = scmp.eq.s32.totalorder %s14, 0
    %p56 = por %p54, %p55
    %p57 = scmp.ne.s32.totalorder %s43, %s44
    %p58 = scmp.eq.s32.totalorder %s15, 1
    %p59 = por %p57, %p58
    %p61 = scmp.ne.s32.totalorder %s44, %s60
    %p62 = scmp.eq.s32.totalorder %s15, 0
    %p63 = por %p61, %p62
    %p64 = scmp.lt.s32.totalorder %s18, %s17
    %s65 = scalar_select %p64, %s18, %s17
    %p66 = scmp.lt.s32.totalorder %s27, %s31
    %s67 = scalar_select %p66, %s27, %s31
    %s68 = ssub.s32 %s16, %s35
    %s69 = ssub.s32 %s65, %s67
    %s70 = sor.u32 %s68, %s69
    %p71 = scmp.eq.s32.totalorder %s70, 0
    %s73 = sadd.s32 %s72, 1
    %s74 = scalar_select %p71, %s72, %s73
    %p77 = pneg %p71
    %p78 = scmp.eq.s32.totalorder %s9, 1
    %p79 = por %p77, %p78
    %p80 = scmp.ne.s32.totalorder %s72, %s75
    %p81 = scmp.eq.s32.totalorder %s9, 0
    %p82 = por %p80, %p81
    %p83 = scmp.ne.s32.totalorder %s72, %s75
    %p84 = scmp.eq.s32.totalorder %s14, 1
    %p85 = por %p83, %p84
    %p86 = scmp.ne.s32.totalorder %s75, %s76
    %p87 = scmp.eq.s32.totalorder %s14, 0
    %p88 = por %p86, %p87
    %p89 = scmp.ne.s32.totalorder %s75, %s76
    %p90 = scmp.eq.s32.totalorder %s15, 1
    %p91 = por %p89, %p90
    %p93 = scmp.ne.s32.totalorder %s76, %s92
    %p94 = scmp.eq.s32.totalorder %s15, 0
    %p95 = por %p93, %p94
    %p96 = scmp.lt.s32.totalorder %s18, %s17
    %s97 = scalar_select %p96, %s18, %s17
    %p98 = scmp.lt.s32.totalorder %s27, %s31
    %s99 = scalar_select %p98, %s27, %s31
    %s100 = ssub.s32 %s16, %s35
    %s101 = ssub.s32 %s97, %s99
    %s102 = sor.u32 %s100, %s101
    %p103 = scmp.eq.s32.totalorder %s102, 0
    %s105 = sadd.s32 %s104, 1
    %s106 = scalar_select %p103, %s104, %s105
    %p109 = pneg %p103
    %p110 = scmp.eq.s32.totalorder %s9, 1
    %p111 = por %p109, %p110
    %p112 = scmp.ne.s32.totalorder %s104, %s107
    %p113 = scmp.eq.s32.totalorder %s9, 0
    %p114 = por %p112, %p113
    %p115 = scmp.ne.s32.totalorder %s104, %s107
    %p116 = scmp.eq.s32.totalorder %s14, 1
    %p117 = por %p115, %p116
    %p118 = scmp.ne.s32.totalorder %s107, %s108
    %p119 = scmp.eq.s32.totalorder %s14, 0
    %p120 = por %p118, %p119
    %p121 = scmp.ne.s32.totalorder %s107, %s108
    %p122 = scmp.eq.s32.totalorder %s15, 1
    %p123 = por %p121, %p122
    %p125 = scmp.ne.s32.totalorder %s108, %s124
    %p126 = scmp.eq.s32.totalorder %s15, 0
    %p127 = por %p125, %p126
    %s128 = ssub.s32 %s16, %s35
    %s129 = ssub.s32 %s17, %s31
    %s130 = sor.u32 %s128, %s129
    %p131 = scmp.eq.s32.totalorder %s130, 0
    %s133 = sadd.s32 %s132, 1
    %s134 = scalar_select %p131, %s132, %s133
    %p137 = pneg %p131
    %p138 = scmp.eq.s32.totalorder %s9, 1
    %p139 = por %p137, %p138
    %p140 = scmp.ne.s32.totalorder %s132, %s135
    %p141 = scmp.eq.s32.totalorder %s9, 0
    %p142 = por %p140, %p141
    %p143 = scmp.ne.s32.totalorder %s132, %s135
    %p144 = scmp.eq.s32.totalorder %s14, 1
    %p145 = por %p143, %p144
    %p146 = scmp.ne.s32.totalorder %s135, %s136
    %p147 = scmp.eq.s32.totalorder %s14, 0
    %p148 = por %p146, %p147
    %p149 = scmp.ne.s32.totalorder %s135, %s136
    %p150 = scmp.eq.s32.totalorder %s15, 1
    %p151 = por %p149, %p150
    %p153 = scmp.ne.s32.totalorder %s136, %s152
    %p154 = scmp.eq.s32.totalorder %s15, 0
    %p155 = por %p153, %p154
    %p156 = scmp.le.s32.totalorder 1, %s9
    %p157 = scmp.lt.s32.totalorder %s9, 3
    %p158 = pnand %p156, %p157
    %p159 = pneg %p158
    // Predicated region
    $region9: #{_lambda_.12} parent=5 // pred_check
      _
    $region10: #{_lambda_.12} parent=5 // pred_check_branch
      %161 = sbr.rel (%p158) target = $region12
    $region11: #{_lambda_.12} parent=5 // pred_region
      %s162 = ssub.s32 %s9, 1
    $region12: #{_lambda_.12} parent=5 // pred_fallthru
      _
    %p163 = scmp.lt.s32.totalorder %s9, 2
    // Predicated region
    $region13: #{_lambda_.12} parent=5 // pred_check
      %p164 = pneg %p163
    $region14: #{_lambda_.12} parent=5 // pred_check_branch
      %166 = sbr.rel (%p164) target = $region16
    $region15: #{_lambda_.12} parent=5 // pred_region
      // Predicated region
      $region17: #{_lambda_.12} parent=15 // pred_check
        %p167 = pneg %p50
      $region18: #{_lambda_.12} parent=15 // pred_check_branch
        %169 = sbr.rel (%p167) target = $region20
      $region19: #{_lambda_.12} parent=15 // pred_region
        %p170 = scmp.lt.s32.totalorder %s16, 1
        %s171 = scalar_select %p170, %s16, 1
        %p172 = scmp.lt.s32.totalorder %s17, 0
        %s173 = scalar_select %p172, %s17, 0
        %s174 = sadd.s32 %s173, %s171
        %s175 = smul.addr %s174, 4
        %s176 = scalar_lea.vmem %s0, %s175
      $region20: #{_lambda_.12} parent=15 // pred_fallthru
        _
      // Predicated region
      $region21: #{_lambda_.12} parent=15 // pred_check
        %p177 = pneg %p82
      $region22: #{_lambda_.12} parent=15 // pred_check_branch
        %179 = sbr.rel (%p177) target = $region24
      $region23: #{_lambda_.12} parent=15 // pred_region
        %p180 = scmp.lt.s32.totalorder %s18, %s17
        %s181 = scalar_select %p180, %s18, %s17
        %p182 = scmp.lt.s32.totalorder %s16, 1
        %s183 = scalar_select %p182, %s16, 1
        %p184 = scmp.lt.s32.totalorder %s181, 0
        %s185 = scalar_select %p184, %s181, 0
        %s186 = sadd.s32 %s185, %s183
        %s187 = smul.addr %s186, 4
        %s188 = scalar_lea.vmem %s1, %s187
        %p189 = scmp.lt.s32.totalorder %s18, %s17
        %s190 = scalar_select %p189, %s18, %s17
      $region24: #{_lambda_.12} parent=15 // pred_fallthru
        _
      // Predicated region
      $region25: #{_lambda_.12} parent=15 // pred_check
        %p191 = pneg %p114
      $region26: #{_lambda_.12} parent=15 // pred_check_branch
        %193 = sbr.rel (%p191) target = $region28
      $region27: #{_lambda_.12} parent=15 // pred_region
        %p194 = scmp.lt.s32.totalorder %s18, %s17
        %s195 = scalar_select %p194, %s18, %s17
        %p196 = scmp.lt.s32.totalorder %s16, 1
        %s197 = scalar_select %p196, %s16, 1
        %p198 = scmp.lt.s32.totalorder %s195, 0
        %s199 = scalar_select %p198, %s195, 0
        %s200 = sadd.s32 %s199, %s197
        %s201 = smul.addr %s200, 4
        %s202 = scalar_lea.vmem %s2, %s201
        %p203 = scmp.lt.s32.totalorder %s18, %s17
        %s204 = scalar_select %p203, %s18, %s17
      $region28: #{_lambda_.12} parent=15 // pred_fallthru
        _
    $region16: #{_lambda_.12} parent=5 // pred_fallthru
      _
    %p205 = scmp.le.s32.totalorder 1, %s9
    %p206 = scmp.lt.s32.totalorder %s9, 3
    %p207 = pnand %p205, %p206
    %p208 = pneg %p207
    // Predicated region
    $region29: #{_lambda_.12} parent=5 // pred_check
      _
    $region30: #{_lambda_.12} parent=5 // pred_check_branch
      %210 = sbr.rel (%p207) target = $region32
    $region31: #{_lambda_.12} parent=5 // pred_region
      %s211 = ssub.s32 %s9, 1
      %p212 = scmp.lt.s32.totalorder %s19, 1
      %s213 = scalar_select %p212, %s19, 1
      %p214 = scmp.lt.s32.totalorder %s20, 0
      %s215 = scalar_select %p214, %s20, 0
      %s216 = sadd.s32 %s215, %s213
      %s217 = smul.addr %s216, 4
      %s218 = scalar_lea.vmem %s0, %s217
      %p219 = pneg %p56
      %p220 = pneg %p53
      %p221 = scmp.lt.s32.totalorder %s21, %s20
      %s222 = scalar_select %p221, %s21, %s20
      %p223 = scmp.lt.s32.totalorder %s19, 1
      %s224 = scalar_select %p223, %s19, 1
      %p225 = scmp.lt.s32.totalorder %s222, 0
      %s226 = scalar_select %p225, %s222, 0
      %s227 = sadd.s32 %s226, %s224
      %s228 = smul.addr %s227, 4
      %s229 = scalar_lea.vmem %s1, %s228
      %p230 = pneg %p88
      %p231 = pneg %p85
      %p232 = scmp.lt.s32.totalorder %s21, %s20
      %s233 = scalar_select %p232, %s21, %s20
      %p234 = scmp.lt.s32.totalorder %s19, 1
      %s235 = scalar_select %p234, %s19, 1
      %p236 = scmp.lt.s32.totalorder %s233, 0
      %s237 = scalar_select %p236, %s233, 0
      %s238 = sadd.s32 %s237, %s235
      %s239 = smul.addr %s238, 4
      %s240 = scalar_lea.vmem %s2, %s239
      %p241 = pneg %p120
      %p242 = pneg %p117
      %p243 = pneg %p148
      %p244 = pneg %p145
      %p245 = scmp.lt.s32.totalorder %s19, 1
      %s246 = scalar_select %p245, %s19, 1
      %p247 = scmp.lt.s32.totalorder %s20, 0
      %s248 = scalar_select %p247, %s20, 0
      %s249 = sadd.s32 %s248, %s246
      %s250 = smul.addr %s249, 4
      %s251 = scalar_lea.vmem %s3, %s250
      %p252 = scmp.lt.s32.totalorder %s19, 1
      %s253 = scalar_select %p252, %s19, 1
      %p254 = scmp.lt.s32.totalorder %s20, 0
      %s255 = scalar_select %p254, %s20, 0
      %s256 = sadd.s32 %s255, %s253
      %s257 = smul.addr %s256, 4
      %s258 = scalar_lea.vmem %s0, %s257
      %p259 = scmp.lt.s32.totalorder %s21, %s20
      %s260 = scalar_select %p259, %s21, %s20
      %p261 = scmp.lt.s32.totalorder %s19, 1
      %s262 = scalar_select %p261, %s19, 1
      %p263 = scmp.lt.s32.totalorder %s260, 0
      %s264 = scalar_select %p263, %s260, 0
      %s265 = sadd.s32 %s264, %s262
      %s266 = smul.addr %s265, 4
      %s267 = scalar_lea.vmem %s1, %s266
      %p268 = scmp.lt.s32.totalorder %s21, %s20
      %s269 = scalar_select %p268, %s21, %s20
      %p270 = scmp.lt.s32.totalorder %s21, %s20
      %s271 = scalar_select %p270, %s21, %s20
      %p272 = scmp.lt.s32.totalorder %s19, 1
      %s273 = scalar_select %p272, %s19, 1
      %p274 = scmp.lt.s32.totalorder %s271, 0
      %s275 = scalar_select %p274, %s271, 0
      %s276 = sadd.s32 %s275, %s273
      %s277 = smul.addr %s276, 4
      %s278 = scalar_lea.vmem %s2, %s277
      %p279 = scmp.lt.s32.totalorder %s21, %s20
      %s280 = scalar_select %p279, %s21, %s20
      %p281 = scmp.lt.s32.totalorder %s19, 1
      %s282 = scalar_select %p281, %s19, 1
      %p283 = scmp.lt.s32.totalorder %s20, 0
      %s284 = scalar_select %p283, %s20, 0
      %s285 = sadd.s32 %s284, %s282
      %s286 = smul.addr %s285, 4
      %s287 = scalar_lea.vmem %s3, %s286
      %p289 = scmp.eq.s32.totalorder %s21, 0
      // Predicated region
      $region33: #{_lambda_.12} parent=31 // pred_check
        %p290 = pneg %p289
      $region34: #{_lambda_.12} parent=31 // pred_check_branch
        %292 = sbr.rel (%p290) target = $region36
      $region35: #{_lambda_.12} parent=31 // pred_region
        %vm293 = vcmask 31744
        %294 = vst.msk [vmem:[#allocation2] sm:$0xff] %vm293, -1e+30
        %295 = vst.msk [vmem:[#allocation3] sm:$0xff] %vm293, 0.0
        %vm296 = vcmask 261120
        %297 = vst.msk [vmem:[#allocation4] sm:$0xff] %vm296, 0.0
      $region36: #{_lambda_.12} parent=31 // pred_fallthru
        _
      %p298 = scmp.le.s32.totalorder %s21, %s20
      // Predicated region
      $region37: #{_lambda_.12} parent=31 // pred_check
        %p299 = pneg %p298
      $region38: #{_lambda_.12} parent=31 // pred_check_branch
        %301 = sbr.rel (%p299) target = $region40
      $region39: #{_lambda_.12} parent=31 // pred_region
        %v302 = vlaneseq
        %v303 = vshrl.u32 %v302, 7
        %v304 = vlaneseq
        %v305 = vand.u32 %v304, 127
        %p306 = scmp.eq.s32.totalorder %s21, %s20
        %vm307 = vcmp.gt.s32.totalorder %v305, %v303
        %s308 = scalar_select %p306, 1, 0
        %v309 = vstv %s308
        %vm310 = vcmp.eq.s32.totalorder %v309, 1
        %vm311 = vmand %vm307, %vm310
        %v312 = vsel %vm311, -1e+30, 0.0
        %v313 = vld [vmem:[%s258] sm:$0xf]
        %v314 = vld [vmem:[%s267] sm:$0xf]
        %v315 = vld [vmem:[%s278] sm:$0xf]
        %vm316 = vcmask 64512
        %v318 = vsel %vm316, %v313, 0
        %v321 = vsel %vm316, %v314, 0
        %323 = vmatprep.subr.bf16.mxu0 0
        %324 = vmatpush1.bf16.xpose.msra.mxu0 0
        %325 = vmatprep.subr.bf16.mxu0 0
        %326 = vmatpush1.bf16.xpose.msra.mxu0 0
        %327 = vmatprep.subr.bf16.mxu0 0
        %328 = vmatpush1.bf16.xpose.msra.mxu0 0
        %329 = vmatprep.subr.bf16.mxu0 0
        %330 = vmatpush1.bf16.xpose.msra.mxu0 0
        %331 = vmatprep.subr.bf16.mxu0 0
        %332 = vmatpush1.bf16.xpose.msra.mxu0 0
        %333 = vmatprep.subr.bf16.mxu0 0
        %334 = vmatpush1.bf16.xpose.msra.mxu0 0
        %335 = vmatprep.subr.bf16.mxu0 0
        %336 = vmatpush1.bf16.xpose.msra.mxu0 0
        %337 = vmatprep.subr.bf16.mxu0 0
        %338 = vmatpush1.bf16.xpose.msra.mxu0 %v321
        %339 = vmatprep.subr.bf16.mxu0 0
        %340 = vmatpush2.bf16.xpose.msra.mxu0 0
        %341 = vmatprep.subr.bf16.mxu0 0
        %342 = vmatpush2.bf16.xpose.msra.mxu0 0
        %343 = vmatprep.subr.bf16.mxu0 0
        %344 = vmatpush2.bf16.xpose.msra.mxu0 0
        %345 = vmatprep.subr.bf16.mxu0 0
        %346 = vmatpush2.bf16.xpose.msra.mxu0 0
        %347 = vmatprep.subr.bf16.mxu0 0
        %348 = vmatpush2.bf16.xpose.msra.mxu0 0
        %349 = vmatprep.subr.bf16.mxu0 0
        %350 = vmatpush2.bf16.xpose.msra.mxu0 0
        %351 = vmatprep.subr.bf16.mxu0 0
        %352 = vmatpush2.bf16.xpose.msra.mxu0 0
        %353 = vmatprep.subr.bf16.mxu0 0
        %354 = vmatpush2.bf16.xpose.msra.mxu0 0
        %355 = vmatprep.mubr.bf16.mxu0 0
        %356 = vmatmul.mubr.bf16.gmra.mxu0 %v318
        %v357 = vpop.f32.mrf.mxu0
        %v358 = vadd.f32 0.0, %v357
        %v359 = vpop.f32.mrf.mxu0
        %v360 = vpop.f32.mrf.mxu0
        %v361 = vpop.f32.mrf.mxu0
        %362 = vdwg.mxu0
        %v363 = vmul.f32 %v358, 0.35355338
        %v364 = vadd.f32 %v363, %v312
        %v365 = vld [vmem:[#allocation2] sm:$0xff]
        %v366 = vsel %vm316, %v364, -inf
        %367 = vmax.xlane.f32.xlu0 %v366
        %v368 = vpop.xlane.xlu0 %367
        %v369 = vmax.f32 %v365, %v368
        %v370 = vsub.f32 %v365, %v369
        %v371 = vmul.f32 %v370, 1.442695
        %v372 = vpow.pop %v371
        %374 = vset.pattern.permute.xlu0 0
        %375 = vperm.xlu0 %374, %v369
        %v376 = vpop.permute.xlu0 %375
        %v378 = vsub.f32 %v364, %v376
        %v379 = vmul.f32 %v378, 1.442695
        %v380 = vpow.pop %v379
        %v381 = vld [vmem:[#allocation3] sm:$0xff]
        %v382 = vmul.f32 %v372, %v381
        %v383 = vsel %vm316, %v380, 0.0
        %384 = vadd.xlane.f32.xlu0 %v383
        %v385 = vpop.xlane.xlu0 %384
        %v386 = vadd.f32 %v382, %v385
        %vm387 = vcmask 7168
        %388 = vst.msk [vmem:[#allocation3] sm:$0xff] %vm387, %v386
        %v389 = vld [vmem:[#allocation4] sm:$0xff]
        %391 = vset.pattern.permute.xlu0 0
        %392 = vperm.xlu0 %391, %v372
        %v393 = vpop.permute.xlu0 %392
        %v395 = vmul.f32 %v393, %v389
        %v396 = vpack.c.bf16 %v380, %v380
        %v398 = vsel %vm316, %v396, 0
        %vm400 = vcmask 1043456
        %v402 = vsel %vm400, %v315, 0
        %404 = vmatprep.subr.bf16.mxu0 0
        %405 = vmatpush1.bf16.msra.mxu0 0
        %406 = vmatprep.subr.bf16.mxu0 0
        %407 = vmatpush1.bf16.msra.mxu0 0
        %408 = vmatprep.subr.bf16.mxu0 0
        %409 = vmatpush1.bf16.msra.mxu0 0
        %410 = vmatprep.subr.bf16.mxu0 0
        %411 = vmatpush1.bf16.msra.mxu0 0
        %412 = vmatprep.subr.bf16.mxu0 0
        %413 = vmatpush1.bf16.msra.mxu0 0
        %414 = vmatprep.subr.bf16.mxu0 0
        %415 = vmatpush1.bf16.msra.mxu0 0
        %416 = vmatprep.subr.bf16.mxu0 0
        %417 = vmatpush1.bf16.msra.mxu0 0
        %418 = vmatprep.subr.bf16.mxu0 0
        %419 = vmatpush1.bf16.msra.mxu0 %v402
        %420 = vmatprep.subr.bf16.mxu0 0
        %421 = vmatpush2.bf16.msra.mxu0 0
        %422 = vmatprep.subr.bf16.mxu0 0
        %423 = vmatpush2.bf16.msra.mxu0 0
        %424 = vmatprep.subr.bf16.mxu0 0
        %425 = vmatpush2.bf16.msra.mxu0 0
        %426 = vmatprep.subr.bf16.mxu0 0
        %427 = vmatpush2.bf16.msra.mxu0 0
        %428 = vmatprep.subr.bf16.mxu0 0
        %429 = vmatpush2.bf16.msra.mxu0 0
        %430 = vmatprep.subr.bf16.mxu0 0
        %431 = vmatpush2.bf16.msra.mxu0 0
        %432 = vmatprep.subr.bf16.mxu0 0
        %433 = vmatpush2.bf16.msra.mxu0 0
        %434 = vmatprep.subr.bf16.mxu0 0
        %435 = vmatpush2.bf16.msra.mxu0 0
        %436 = vmatprep.mubr.bf16.mxu0 0
        %437 = vmatmul.mubr.bf16.gmra.mxu0 %v398
        %v438 = vpop.f32.mrf.mxu0
        %v439 = vadd.f32 0.0, %v438
        %v440 = vpop.f32.mrf.mxu0
        %v441 = vpop.f32.mrf.mxu0
        %v442 = vpop.f32.mrf.mxu0
        %443 = vdwg.mxu0
        %v444 = vadd.f32 %v395, %v439
        %445 = vst.msk [vmem:[#allocation4] sm:$0xff] %vm316, %v444
        %446 = vst.msk [vmem:[#allocation2] sm:$0xff] %vm387, %v369
        %v448 = vunpack.c.l.b16 %v313
        %v449 = vpack.c.b16 %v448, %v448
        %450 = vrot.lane.b32.xlu0 %v449, 120
        %v451 = vpop.permute.xlu0 %450
        %v453 = vunpack.c.l.b16 %v314
        %v454 = vpack.c.b16 %v453, %v453
        %455 = vrot.lane.b32.xlu0 %v454, 120
        %v456 = vpop.permute.xlu0 %455
        %v458 = vsel %vm316, %v451, 0
        %v461 = vsel %vm316, %v456, 0
        %463 = vmatprep.subr.bf16.mxu0 0
        %464 = vmatpush1.bf16.xpose.msra.mxu0 0
        %465 = vmatprep.subr.bf16.mxu0 0
        %466 = vmatpush1.bf16.xpose.msra.mxu0 0
        %467 = vmatprep.subr.bf16.mxu0 0
        %468 = vmatpush1.bf16.xpose.msra.mxu0 0
        %469 = vmatprep.subr.bf16.mxu0 0
        %470 = vmatpush1.bf16.xpose.msra.mxu0 0
        %471 = vmatprep.subr.bf16.mxu0 0
        %472 = vmatpush1.bf16.xpose.msra.mxu0 0
        %473 = vmatprep.subr.bf16.mxu0 0
        %474 = vmatpush1.bf16.xpose.msra.mxu0 0
        %475 = vmatprep.subr.bf16.mxu0 0
        %476 = vmatpush1.bf16.xpose.msra.mxu0 0
        %477 = vmatprep.subr.bf16.mxu0 0
        %478 = vmatpush1.bf16.xpose.msra.mxu0 %v461
        %479 = vmatprep.subr.bf16.mxu0 0
        %480 = vmatpush2.bf16.xpose.msra.mxu0 0
        %481 = vmatprep.subr.bf16.mxu0 0
        %482 = vmatpush2.bf16.xpose.msra.mxu0 0
        %483 = vmatprep.subr.bf16.mxu0 0
        %484 = vmatpush2.bf16.xpose.msra.mxu0 0
        %485 = vmatprep.subr.bf16.mxu0 0
        %486 = vmatpush2.bf16.xpose.msra.mxu0 0
        %487 = vmatprep.subr.bf16.mxu0 0
        %488 = vmatpush2.bf16.xpose.msra.mxu0 0
        %489 = vmatprep.subr.bf16.mxu0 0
        %490 = vmatpush2.bf16.xpose.msra.mxu0 0
        %491 = vmatprep.subr.bf16.mxu0 0
        %492 = vmatpush2.bf16.xpose.msra.mxu0 0
        %493 = vmatprep.subr.bf16.mxu0 0
        %494 = vmatpush2.bf16.xpose.msra.mxu0 0
        %495 = vmatprep.mubr.bf16.mxu0 0
        %496 = vmatmul.mubr.bf16.gmra.mxu0 %v458
        %v497 = vpop.f32.mrf.mxu0
        %v498 = vadd.f32 0.0, %v497
        %v499 = vpop.f32.mrf.mxu0
        %v500 = vpop.f32.mrf.mxu0
        %v501 = vpop.f32.mrf.mxu0
        %502 = vdwg.mxu0
        %v503 = vmul.f32 %v498, 0.35355338
        %v504 = vadd.f32 %v503, %v312
        %v505 = vld [vmem:[#allocation2] sm:$0xff]
        %v506 = vsel %vm316, %v504, -inf
        %507 = vmax.xlane.f32.xlu0 %v506
        %v508 = vpop.xlane.xlu0 %507
        %v509 = vmax.f32 %v505, %v508
        %v510 = vsub.f32 %v505, %v509
        %v511 = vmul.f32 %v510, 1.442695
        %v512 = vpow.pop %v511
        %514 = vset.pattern.permute.xlu0 1
        %515 = vperm.xlu0 %514, %v509
        %v516 = vpop.permute.xlu0 %515
        %v518 = vsub.f32 %v504, %v516
        %v519 = vmul.f32 %v518, 1.442695
        %v520 = vpow.pop %v519
        %v521 = vld [vmem:[#allocation3] sm:$0xff]
        %v522 = vmul.f32 %v512, %v521
        %v523 = vsel %vm316, %v520, 0.0
        %524 = vadd.xlane.f32.xlu0 %v523
        %v525 = vpop.xlane.xlu0 %524
        %v526 = vadd.f32 %v522, %v525
        %vm527 = vcmask 15368
        %528 = vst.msk [vmem:[#allocation3] sm:$0xff] %vm527, %v526
        %v529 = vld [vmem:[#allocation4] sm:$0xff]
        %531 = vset.pattern.permute.xlu0 1
        %532 = vperm.xlu0 %531, %v512
        %v533 = vpop.permute.xlu0 %532
        %v535 = vmul.f32 %v533, %v529
        %v536 = vpack.c.bf16 %v520, %v520
        %v538 = vunpack.c.l.b16 %v315
        %v539 = vpack.c.b16 %v538, %v538
        %540 = vrot.lane.b32.xlu0 %v539, 120
        %v541 = vpop.permute.xlu0 %540
        %v543 = vsel %vm316, %v536, 0
        %v546 = vsel %vm400, %v541, 0
        %548 = vmatprep.subr.bf16.mxu0 0
        %549 = vmatpush1.bf16.msra.mxu0 0
        %550 = vmatprep.subr.bf16.mxu0 0
        %551 = vmatpush1.bf16.msra.mxu0 0
        %552 = vmatprep.subr.bf16.mxu0 0
        %553 = vmatpush1.bf16.msra.mxu0 0
        %554 = vmatprep.subr.bf16.mxu0 0
        %555 = vmatpush1.bf16.msra.mxu0 0
        %556 = vmatprep.subr.bf16.mxu0 0
        %557 = vmatpush1.bf16.msra.mxu0 0
        %558 = vmatprep.subr.bf16.mxu0 0
        %559 = vmatpush1.bf16.msra.mxu0 0
        %560 = vmatprep.subr.bf16.mxu0 0
        %561 = vmatpush1.bf16.msra.mxu0 0
        %562 = vmatprep.subr.bf16.mxu0 0
        %563 = vmatpush1.bf16.msra.mxu0 %v546
        %564 = vmatprep.subr.bf16.mxu0 0
        %565 = vmatpush2.bf16.msra.mxu0 0
        %566 = vmatprep.subr.bf16.mxu0 0
        %567 = vmatpush2.bf16.msra.mxu0 0
        %568 = vmatprep.subr.bf16.mxu0 0
        %569 = vmatpush2.bf16.msra.mxu0 0
        %570 = vmatprep.subr.bf16.mxu0 0
        %571 = vmatpush2.bf16.msra.mxu0 0
        %572 = vmatprep.subr.bf16.mxu0 0
        %573 = vmatpush2.bf16.msra.mxu0 0
        %574 = vmatprep.subr.bf16.mxu0 0
        %575 = vmatpush2.bf16.msra.mxu0 0
        %576 = vmatprep.subr.bf16.mxu0 0
        %577 = vmatpush2.bf16.msra.mxu0 0
        %578 = vmatprep.subr.bf16.mxu0 0
        %579 = vmatpush2.bf16.msra.mxu0 0
        %580 = vmatprep.mubr.bf16.mxu0 0
        %581 = vmatmul.mubr.bf16.gmra.mxu0 %v543
        %v582 = vpop.f32.mrf.mxu0
        %v583 = vadd.f32 0.0, %v582
        %v584 = vpop.f32.mrf.mxu0
        %v585 = vpop.f32.mrf.mxu0
        %v586 = vpop.f32.mrf.mxu0
        %587 = vdwg.mxu0
        %589 = vrot.lane.b32.xlu0 %v583, 8
        %v590 = vpop.permute.xlu0 %589
        %v592 = vadd.f32 %v535, %v590
        %vm593 = vcmask 130112
        %594 = vst.msk [vmem:[#allocation4] sm:$0xff] %vm593, %v592
        %595 = vst.msk [vmem:[#allocation2] sm:$0xff] %vm527, %v509
        %596 = vrot.lane.b32.xlu0 %v449, 112
        %v597 = vpop.permute.xlu0 %596
        %598 = vrot.lane.b32.xlu0 %v454, 112
        %v599 = vpop.permute.xlu0 %598
        %v601 = vsel %vm316, %v597, 0
        %v604 = vsel %vm316, %v599, 0
        %606 = vmatprep.subr.bf16.mxu0 0
        %607 = vmatpush1.bf16.xpose.msra.mxu0 0
        %608 = vmatprep.subr.bf16.mxu0 0
        %609 = vmatpush1.bf16.xpose.msra.mxu0 0
        %610 = vmatprep.subr.bf16.mxu0 0
        %611 = vmatpush1.bf16.xpose.msra.mxu0 0
        %612 = vmatprep.subr.bf16.mxu0 0
        %613 = vmatpush1.bf16.xpose.msra.mxu0 0
        %614 = vmatprep.subr.bf16.mxu0 0
        %615 = vmatpush1.bf16.xpose.msra.mxu0 0
        %616 = vmatprep.subr.bf16.mxu0 0
        %617 = vmatpush1.bf16.xpose.msra.mxu0 0
        %618 = vmatprep.subr.bf16.mxu0 0
        %619 = vmatpush1.bf16.xpose.msra.mxu0 0
        %620 = vmatprep.subr.bf16.mxu0 0
        %621 = vmatpush1.bf16.xpose.msra.mxu0 %v604
        %622 = vmatprep.subr.bf16.mxu0 0
        %623 = vmatpush2.bf16.xpose.msra.mxu0 0
        %624 = vmatprep.subr.bf16.mxu0 0
        %625 = vmatpush2.bf16.xpose.msra.mxu0 0
        %626 = vmatprep.subr.bf16.mxu0 0
        %627 = vmatpush2.bf16.xpose.msra.mxu0 0
        %628 = vmatprep.subr.bf16.mxu0 0
        %629 = vmatpush2.bf16.xpose.msra.mxu0 0
        %630 = vmatprep.subr.bf16.mxu0 0
        %631 = vmatpush2.bf16.xpose.msra.mxu0 0
        %632 = vmatprep.subr.bf16.mxu0 0
        %633 = vmatpush2.bf16.xpose.msra.mxu0 0
        %634 = vmatprep.subr.bf16.mxu0 0
        %635 = vmatpush2.bf16.xpose.msra.mxu0 0
        %636 = vmatprep.subr.bf16.mxu0 0
        %637 = vmatpush2.bf16.xpose.msra.mxu0 0
        %638 = vmatprep.mubr.bf16.mxu0 0
        %639 = vmatmul.mubr.bf16.gmra.mxu0 %v601
        %v640 = vpop.f32.mrf.mxu0
        %v641 = vadd.f32 0.0, %v640
        %v642 = vpop.f32.mrf.mxu0
        %v643 = vpop.f32.mrf.mxu0
        %v644 = vpop.f32.mrf.mxu0
        %645 = vdwg.mxu0
        %v646 = vmul.f32 %v641, 0.35355338
        %v647 = vadd.f32 %v646, %v312
        %v648 = vld [vmem:[#allocation2] sm:$0xff]
        %v649 = vsel %vm316, %v647, -inf
        %650 = vmax.xlane.f32.xlu0 %v649
        %v651 = vpop.xlane.xlu0 %650
        %v652 = vmax.f32 %v648, %v651
        %v653 = vsub.f32 %v648, %v652
        %v654 = vmul.f32 %v653, 1.442695
        %v655 = vpow.pop %v654
        %657 = vset.pattern.permute.xlu0 2
        %658 = vperm.xlu0 %657, %v652
        %v659 = vpop.permute.xlu0 %658
        %v661 = vsub.f32 %v647, %v659
        %v662 = vmul.f32 %v661, 1.442695
        %v663 = vpow.pop %v662
        %v664 = vld [vmem:[#allocation3] sm:$0xff]
        %v665 = vmul.f32 %v655, %v664
        %v666 = vsel %vm316, %v663, 0.0
        %667 = vadd.xlane.f32.xlu0 %v666
        %v668 = vpop.xlane.xlu0 %667
        %v669 = vadd.f32 %v665, %v668
        %vm670 = vcmask 23568
        %671 = vst.msk [vmem:[#allocation3] sm:$0xff] %vm670, %v669
        %v672 = vld [vmem:[#allocation4] sm:$0xff]
        %674 = vset.pattern.permute.xlu0 2
        %675 = vperm.xlu0 %674, %v655
        %v676 = vpop.permute.xlu0 %675
        %v678 = vmul.f32 %v676, %v672
        %v679 = vpack.c.bf16 %v663, %v663
        %680 = vrot.lane.b32.xlu0 %v539, 112
        %v681 = vpop.permute.xlu0 %680
        %v683 = vsel %vm316, %v679, 0
        %v686 = vsel %vm400, %v681, 0
        %688 = vmatprep.subr.bf16.mxu0 0
        %689 = vmatpush1.bf16.msra.mxu0 0
        %690 = vmatprep.subr.bf16.mxu0 0
        %691 = vmatpush1.bf16.msra.mxu0 0
        %692 = vmatprep.subr.bf16.mxu0 0
        %693 = vmatpush1.bf16.msra.mxu0 0
        %694 = vmatprep.subr.bf16.mxu0 0
        %695 = vmatpush1.bf16.msra.mxu0 0
        %696 = vmatprep.subr.bf16.mxu0 0
        %697 = vmatpush1.bf16.msra.mxu0 0
        %698 = vmatprep.subr.bf16.mxu0 0
        %699 = vmatpush1.bf16.msra.mxu0 0
        %700 = vmatprep.subr.bf16.mxu0 0
        %701 = vmatpush1.bf16.msra.mxu0 0
        %702 = vmatprep.subr.bf16.mxu0 0
        %703 = vmatpush1.bf16.msra.mxu0 %v686
        %704 = vmatprep.subr.bf16.mxu0 0
        %705 = vmatpush2.bf16.msra.mxu0 0
        %706 = vmatprep.subr.bf16.mxu0 0
        %707 = vmatpush2.bf16.msra.mxu0 0
        %708 = vmatprep.subr.bf16.mxu0 0
        %709 = vmatpush2.bf16.msra.mxu0 0
        %710 = vmatprep.subr.bf16.mxu0 0
        %711 = vmatpush2.bf16.msra.mxu0 0
        %712 = vmatprep.subr.bf16.mxu0 0
        %713 = vmatpush2.bf16.msra.mxu0 0
        %714 = vmatprep.subr.bf16.mxu0 0
        %715 = vmatpush2.bf16.msra.mxu0 0
        %716 = vmatprep.subr.bf16.mxu0 0
        %717 = vmatpush2.bf16.msra.mxu0 0
        %718 = vmatprep.subr.bf16.mxu0 0
        %719 = vmatpush2.bf16.msra.mxu0 0
        %720 = vmatprep.mubr.bf16.mxu0 0
        %721 = vmatmul.mubr.bf16.gmra.mxu0 %v683
        %v722 = vpop.f32.mrf.mxu0
        %v723 = vadd.f32 0.0, %v722
        %v724 = vpop.f32.mrf.mxu0
        %v725 = vpop.f32.mrf.mxu0
        %v726 = vpop.f32.mrf.mxu0
        %727 = vdwg.mxu0
        %729 = vrot.lane.b32.xlu0 %v723, 16
        %v730 = vpop.permute.xlu0 %729
        %v732 = vadd.f32 %v678, %v730
        %vm733 = vcmask 195712
        %734 = vst.msk [vmem:[#allocation4] sm:$0xff] %vm733, %v732
        %735 = vst.msk [vmem:[#allocation2] sm:$0xff] %vm670, %v652
        %736 = vrot.lane.b32.xlu0 %v449, 104
        %v737 = vpop.permute.xlu0 %736
        %738 = vrot.lane.b32.xlu0 %v454, 104
        %v739 = vpop.permute.xlu0 %738
        %v741 = vsel %vm316, %v737, 0
        %v744 = vsel %vm316, %v739, 0
        %746 = vmatprep.subr.bf16.mxu0 0
        %747 = vmatpush1.bf16.xpose.msra.mxu0 0
        %748 = vmatprep.subr.bf16.mxu0 0
        %749 = vmatpush1.bf16.xpose.msra.mxu0 0
        %750 = vmatprep.subr.bf16.mxu0 0
        %751 = vmatpush1.bf16.xpose.msra.mxu0 0
        %752 = vmatprep.subr.bf16.mxu0 0
        %753 = vmatpush1.bf16.xpose.msra.mxu0 0
        %754 = vmatprep.subr.bf16.mxu0 0
        %755 = vmatpush1.bf16.xpose.msra.mxu0 0
        %756 = vmatprep.subr.bf16.mxu0 0
        %757 = vmatpush1.bf16.xpose.msra.mxu0 0
        %758 = vmatprep.subr.bf16.mxu0 0
        %759 = vmatpush1.bf16.xpose.msra.mxu0 0
        %760 = vmatprep.subr.bf16.mxu0 0
        %761 = vmatpush1.bf16.xpose.msra.mxu0 %v744
        %762 = vmatprep.subr.bf16.mxu0 0
        %763 = vmatpush2.bf16.xpose.msra.mxu0 0
        %764 = vmatprep.subr.bf16.mxu0 0
        %765 = vmatpush2.bf16.xpose.msra.mxu0 0
        %766 = vmatprep.subr.bf16.mxu0 0
        %767 = vmatpush2.bf16.xpose.msra.mxu0 0
        %768 = vmatprep.subr.bf16.mxu0 0
        %769 = vmatpush2.bf16.xpose.msra.mxu0 0
        %770 = vmatprep.subr.bf16.mxu0 0
        %771 = vmatpush2.bf16.xpose.msra.mxu0 0
        %772 = vmatprep.subr.bf16.mxu0 0
        %773 = vmatpush2.bf16.xpose.msra.mxu0 0
        %774 = vmatprep.subr.bf16.mxu0 0
        %775 = vmatpush2.bf16.xpose.msra.mxu0 0
        %776 = vmatprep.subr.bf16.mxu0 0
        %777 = vmatpush2.bf16.xpose.msra.mxu0 0
        %778 = vmatprep.mubr.bf16.mxu0 0
        %779 = vmatmul.mubr.bf16.gmra.mxu0 %v741
        %v780 = vpop.f32.mrf.mxu0
        %v781 = vadd.f32 0.0, %v780
        %v782 = vpop.f32.mrf.mxu0
        %v783 = vpop.f32.mrf.mxu0
        %v784 = vpop.f32.mrf.mxu0
        %785 = vdwg.mxu0
        %v786 = vmul.f32 %v781, 0.35355338
        %v787 = vadd.f32 %v786, %v312
        %v788 = vld [vmem:[#allocation2] sm:$0xff]
        %v789 = vsel %vm316, %v787, -inf
        %790 = vmax.xlane.f32.xlu0 %v789
        %v791 = vpop.xlane.xlu0 %790
        %v792 = vmax.f32 %v788, %v791
        %v793 = vsub.f32 %v788, %v792
        %v794 = vmul.f32 %v793, 1.442695
        %v795 = vpow.pop %v794
        %797 = vset.pattern.permute.xlu0 3
        %798 = vperm.xlu0 %797, %v792
        %v799 = vpop.permute.xlu0 %798
        %v801 = vsub.f32 %v787, %v799
        %v802 = vmul.f32 %v801, 1.442695
        %v803 = vpow.pop %v802
        %v804 = vld [vmem:[#allocation3] sm:$0xff]
        %v805 = vmul.f32 %v795, %v804
        %v806 = vsel %vm316, %v803, 0.0
        %807 = vadd.xlane.f32.xlu0 %v806
        %v808 = vpop.xlane.xlu0 %807
        %v809 = vadd.f32 %v805, %v808
        %vm810 = vcmask 31768
        %811 = vst.msk [vmem:[#allocation3] sm:$0xff] %vm810, %v809
        %v812 = vld [vmem:[#allocation4] sm:$0xff]
        %814 = vset.pattern.permute.xlu0 3
        %815 = vperm.xlu0 %814, %v795
        %v816 = vpop.permute.xlu0 %815
        %v818 = vmul.f32 %v816, %v812
        %v819 = vpack.c.bf16 %v803, %v803
        %820 = vrot.lane.b32.xlu0 %v539, 104
        %v821 = vpop.permute.xlu0 %820
        %v823 = vsel %vm316, %v819, 0
        %v826 = vsel %vm400, %v821, 0
        %828 = vmatprep.subr.bf16.mxu0 0
        %829 = vmatpush1.bf16.msra.mxu0 0
        %830 = vmatprep.subr.bf16.mxu0 0
        %831 = vmatpush1.bf16.msra.mxu0 0
        %832 = vmatprep.subr.bf16.mxu0 0
        %833 = vmatpush1.bf16.msra.mxu0 0
        %834 = vmatprep.subr.bf16.mxu0 0
        %835 = vmatpush1.bf16.msra.mxu0 0
        %836 = vmatprep.subr.bf16.mxu0 0
        %837 = vmatpush1.bf16.msra.mxu0 0
        %838 = vmatprep.subr.bf16.mxu0 0
        %839 = vmatpush1.bf16.msra.mxu0 0
        %840 = vmatprep.subr.bf16.mxu0 0
        %841 = vmatpush1.bf16.msra.mxu0 0
        %842 = vmatprep.subr.bf16.mxu0 0
        %843 = vmatpush1.bf16.msra.mxu0 %v826
        %844 = vmatprep.subr.bf16.mxu0 0
        %845 = vmatpush2.bf16.msra.mxu0 0
        %846 = vmatprep.subr.bf16.mxu0 0
        %847 = vmatpush2.bf16.msra.mxu0 0
        %848 = vmatprep.subr.bf16.mxu0 0
        %849 = vmatpush2.bf16.msra.mxu0 0
        %850 = vmatprep.subr.bf16.mxu0 0
        %851 = vmatpush2.bf16.msra.mxu0 0
        %852 = vmatprep.subr.bf16.mxu0 0
        %853 = vmatpush2.bf16.msra.mxu0 0
        %854 = vmatprep.subr.bf16.mxu0 0
        %855 = vmatpush2.bf16.msra.mxu0 0
        %856 = vmatprep.subr.bf16.mxu0 0
        %857 = vmatpush2.bf16.msra.mxu0 0
        %858 = vmatprep.subr.bf16.mxu0 0
        %859 = vmatpush2.bf16.msra.mxu0 0
        %860 = vmatprep.mubr.bf16.mxu0 0
        %861 = vmatmul.mubr.bf16.gmra.mxu0 %v823
        %v862 = vpop.f32.mrf.mxu0
        %v863 = vadd.f32 0.0, %v862
        %v864 = vpop.f32.mrf.mxu0
        %v865 = vpop.f32.mrf.mxu0
        %v866 = vpop.f32.mrf.mxu0
        %867 = vdwg.mxu0
        %869 = vrot.lane.b32.xlu0 %v863, 24
        %v870 = vpop.permute.xlu0 %869
        %v872 = vadd.f32 %v818, %v870
        %vm873 = vcmask 261312
        %874 = vst.msk [vmem:[#allocation4] sm:$0xff] %vm873, %v872
        %875 = vst.msk [vmem:[#allocation2] sm:$0xff] %vm810, %v792
      $region40: #{_lambda_.12} parent=31 // pred_fallthru
        _
      // Predicated region
      $region41: #{_lambda_.12} parent=31 // pred_check
        %p876 = pneg %p289
      $region42: #{_lambda_.12} parent=31 // pred_check_branch
        %878 = sbr.rel (%p876) target = $region44
      $region43: #{_lambda_.12} parent=31 // pred_region
        %v879 = vld [vmem:[#allocation3] sm:$0xff]
        %v880 = vrcp.pop %v879
        %v881 = vld [vmem:[#allocation4] sm:$0xff]
        %883 = vset.pattern.permute.xlu0 0
        %884 = vperm.xlu0 %883, %v880
        %v885 = vpop.permute.xlu0 %884
        %v887 = vmul.f32 %v881, %v885
        %888 = vset.pattern.permute.xlu0 1
        %889 = vperm.xlu0 %888, %v880
        %v890 = vpop.permute.xlu0 %889
        %v892 = vmul.f32 %v881, %v890
        %893 = vset.pattern.permute.xlu0 2
        %894 = vperm.xlu0 %893, %v880
        %v895 = vpop.permute.xlu0 %894
        %v897 = vmul.f32 %v881, %v895
        %898 = vset.pattern.permute.xlu0 3
        %899 = vperm.xlu0 %898, %v880
        %v900 = vpop.permute.xlu0 %899
        %v902 = vmul.f32 %v881, %v900
        %vm903 = vcmask 64512
        %v904 = vsel %vm903, %v887, %v892
        %vm905 = vcmask 130048
        %v906 = vsel %vm905, %v904, %v897
        %vm907 = vcmask 195584
        %v908 = vsel %vm907, %v906, %v902
        %v909 = vpack.c.bf16 %v908, %v908
        %vm910 = vcmask 257024
        %911 = vst.msk [vmem:[%s287] sm:$0xf] %vm910, %v909
      $region44: #{_lambda_.12} parent=31 // pred_fallthru
        _
      %p912 = scmp.lt.s32.totalorder %s19, 1
      %s913 = scalar_select %p912, %s19, 1
      %p914 = scmp.lt.s32.totalorder %s20, 0
      %s915 = scalar_select %p914, %s20, 0
      %s916 = sadd.s32 %s915, %s913
      %s917 = smul.addr %s916, 4
      %s918 = scalar_lea.vmem %s3, %s917
      // Predicated region
      $region45: #{_lambda_.12} parent=31 // pred_check
        %p919 = pneg %p145
      $region46: #{_lambda_.12} parent=31 // pred_check_branch
        %921 = sbr.rel (%p919) target = $region48
      $region47: #{_lambda_.12} parent=31 // pred_region
        _
      $region48: #{_lambda_.12} parent=31 // pred_fallthru
        _
    $region32: #{_lambda_.12} parent=5 // pred_fallthru
      _
    %p922 = scmp.le.s32.totalorder 2, %s9
    // Predicated region
    $region49: #{_lambda_.12} parent=5 // pred_check
      %p923 = pneg %p922
    $region50: #{_lambda_.12} parent=5 // pred_check_branch
      %925 = sbr.rel (%p923) target = $region52
    $region51: #{_lambda_.12} parent=5 // pred_region
      %s926 = ssub.s32 %s9, 2
      // Predicated region
      $region53: #{_lambda_.12} parent=51 // pred_check
        %p927 = pneg %p151
      $region54: #{_lambda_.12} parent=51 // pred_check_branch
        %929 = sbr.rel (%p927) target = $region56
      $region55: #{_lambda_.12} parent=51 // pred_region
        %p930 = scmp.lt.s32.totalorder %s22, 1
        %s931 = scalar_select %p930, %s22, 1
        %p932 = scmp.lt.s32.totalorder %s23, 0
        %s933 = scalar_select %p932, %s23, 0
        %s934 = sadd.s32 %s933, %s931
        %s935 = smul.addr %s934, 4
        %s936 = scalar_lea.vmem %s3, %s935
      $region56: #{_lambda_.12} parent=51 // pred_fallthru
        _
    $region52: #{_lambda_.12} parent=5 // pred_fallthru
      _
  $region6: #{_lambda_.12} parent=0 // loop_footer
    %s13 = sadd.s32 1, %s9
  $region7: #{_lambda_.12} parent=0 // loop_footer_branch
    %8 = sbr.rel target = $region3
  $region8: #{_lambda_.12} parent=0 // loop_exit
    _

// kernel: _lambda_.15
$region0: #{_lambda_.15}
  #allocation0 [shape = 'u32[]', space=smem, size = 0x4, offset = 0x4, fixed_abs, tag = 'smem constant byte address 0x4 - core index']
  #allocation1 [shape = 'u32[144,128]{1,0:T(1,128)}', space=vmem, size = 0x12000, scoped, tag = 'internal scratch']
  %s0 = inlined_call_operand.vmem [shape: bf16[16,128], index: 0, kind: input, shape index: {}]
  %s1 = inlined_call_operand.vmem [shape: bf16[128,32], index: 1, kind: input, shape index: {}]
  %s2 = inlined_call_operand.vmem [shape: bf16[1,32], index: 2, kind: input, shape index: {}]
  %s3 = inlined_call_operand.vmem [shape: bf16[16,32], index: 3, kind: input, shape index: {}]
  %s4 = inlined_call_operand.vmem [shape: bf16[16,32], index: 4, kind: output, shape index: {}]
  %s5 = sld [smem:[#allocation0]]
  $region26: #{_lambda_.15} parent=0
    _
  %s7 = ssub.s32 1, %s5
  %s8 = scalar_select 0, %s7, %s5
  // Predicated region
  $region2: #{_lambda_.15} parent=0 // pred_check
    _
  $region3: #{_lambda_.15} parent=0 // pred_check_branch
    %10 = sbr.rel (0) target = $region5
  $region4: #{_lambda_.15} parent=0 // pred_region
    _
  $region5: #{_lambda_.15} parent=0 // pred_fallthru
    _
  // Predicated region
  $region6: #{_lambda_.15} parent=0 // pred_check
    _
  $region7: #{_lambda_.15} parent=0 // pred_check_branch
    %12 = sbr.rel (0) target = $region9
  $region8: #{_lambda_.15} parent=0 // pred_region
    _
  $region9: #{_lambda_.15} parent=0 // pred_fallthru
    _
  // Predicated region
  $region10: #{_lambda_.15} parent=0 // pred_check
    _
  $region11: #{_lambda_.15} parent=0 // pred_check_branch
    %14 = sbr.rel (0) target = $region13
  $region12: #{_lambda_.15} parent=0 // pred_region
    _
  $region13: #{_lambda_.15} parent=0 // pred_fallthru
    _
  // Predicated region
  $region14: #{_lambda_.15} parent=0 // pred_check
    _
  $region15: #{_lambda_.15} parent=0 // pred_check_branch
    %16 = sbr.rel (0) target = $region17
  $region16: #{_lambda_.15} parent=0 // pred_region
    _
  $region17: #{_lambda_.15} parent=0 // pred_fallthru
    _
  %v18 = vld [vmem:[%s0] sm:$0xf]
  %v19 = vld [vmem:[%s0 + $0x4] sm:$0xf]
  %v20 = vld [vmem:[%s1] sm:$0xf]
  %v21 = vld [vmem:[%s1 + $0x4] sm:$0xf]
  %v22 = vld [vmem:[%s1 + $0x8] sm:$0xf]
  %v23 = vld [vmem:[%s1 + $0xc] sm:$0xf]
  %v24 = vld [vmem:[%s1 + $0x10] sm:$0xf]
  %v25 = vld [vmem:[%s1 + $0x14] sm:$0xf]
  %v26 = vld [vmem:[%s1 + $0x18] sm:$0xf]
  %v27 = vld [vmem:[%s1 + $0x1c] sm:$0xf]
  %v28 = vld [vmem:[%s1 + $0x20] sm:$0xf]
  %v29 = vld [vmem:[%s1 + $0x24] sm:$0xf]
  %v30 = vld [vmem:[%s1 + $0x28] sm:$0xf]
  %v31 = vld [vmem:[%s1 + $0x2c] sm:$0xf]
  %v32 = vld [vmem:[%s1 + $0x30] sm:$0xf]
  %v33 = vld [vmem:[%s1 + $0x34] sm:$0xf]
  %v34 = vld [vmem:[%s1 + $0x38] sm:$0xf]
  %v35 = vld [vmem:[%s1 + $0x3c] sm:$0xf]
  %v36 = vld [vmem:[%s2] sm:$0x1]
  %v37 = vunpack.c.l.bf16 %v36
  %v38 = vlaneseq
  %v39 = vshrl.u32 %v38, 7
  %v40 = vsub.s32 0, %v39
  %v41 = vrot.slane %v37, %v40
  %v44 = vunpack.c.l.b16 %v18
  %v45 = vunpack.c.l.b16 %v19
  %v46 = vpack.c.b16 %v45, %v44
  %v64 = vunpack.c.l.b16 %v20
  %v65 = vunpack.c.l.b16 %v21
  %v66 = vunpack.c.l.b16 %v22
  %v67 = vunpack.c.l.b16 %v23
  %v68 = vunpack.c.l.b16 %v24
  %v69 = vunpack.c.l.b16 %v25
  %v70 = vunpack.c.l.b16 %v26
  %v71 = vunpack.c.l.b16 %v27
  %v72 = vunpack.c.l.b16 %v28
  %v73 = vunpack.c.l.b16 %v29
  %v74 = vunpack.c.l.b16 %v30
  %v75 = vunpack.c.l.b16 %v31
  %v76 = vunpack.c.l.b16 %v32
  %v77 = vunpack.c.l.b16 %v33
  %v78 = vunpack.c.l.b16 %v34
  %v79 = vunpack.c.l.b16 %v35
  %v80 = vpack.c.b16 %v65, %v64
  %v81 = vpack.c.b16 %v67, %v66
  %v82 = vpack.c.b16 %v69, %v68
  %v83 = vpack.c.b16 %v71, %v70
  %v84 = vpack.c.b16 %v73, %v72
  %v85 = vpack.c.b16 %v75, %v74
  %v86 = vpack.c.b16 %v77, %v76
  %v87 = vpack.c.b16 %v79, %v78
  %96 = vmatprep.subr.bf16.mxu0 0
  %97 = vmatpush1.bf16.msra.mxu0 %v87
  %98 = vmatprep.subr.bf16.mxu0 0
  %99 = vmatpush1.bf16.msra.mxu0 %v86
  %100 = vmatprep.subr.bf16.mxu0 0
  %101 = vmatpush1.bf16.msra.mxu0 %v85
  %102 = vmatprep.subr.bf16.mxu0 0
  %103 = vmatpush1.bf16.msra.mxu0 %v84
  %104 = vmatprep.subr.bf16.mxu0 0
  %105 = vmatpush1.bf16.msra.mxu0 %v83
  %106 = vmatprep.subr.bf16.mxu0 0
  %107 = vmatpush1.bf16.msra.mxu0 %v82
  %108 = vmatprep.subr.bf16.mxu0 0
  %109 = vmatpush1.bf16.msra.mxu0 %v81
  %110 = vmatprep.subr.bf16.mxu0 0
  %111 = vmatpush1.bf16.msra.mxu0 %v80
  %112 = vmatprep.subr.bf16.mxu0 0
  %113 = vmatpush2.bf16.msra.mxu0 0
  %114 = vmatprep.subr.bf16.mxu0 0
  %115 = vmatpush2.bf16.msra.mxu0 0
  %116 = vmatprep.subr.bf16.mxu0 0
  %117 = vmatpush2.bf16.msra.mxu0 0
  %118 = vmatprep.subr.bf16.mxu0 0
  %119 = vmatpush2.bf16.msra.mxu0 0
  %120 = vmatprep.subr.bf16.mxu0 0
  %121 = vmatpush2.bf16.msra.mxu0 0
  %122 = vmatprep.subr.bf16.mxu0 0
  %123 = vmatpush2.bf16.msra.mxu0 0
  %124 = vmatprep.subr.bf16.mxu0 0
  %125 = vmatpush2.bf16.msra.mxu0 0
  %126 = vmatprep.subr.bf16.mxu0 0
  %127 = vmatpush2.bf16.msra.mxu0 0
  %128 = vmatprep.mubr.bf16.mxu0 0
  %129 = vmatmul.mubr.bf16.gmra.mxu0 %v46
  %v130 = vpop.f32.mrf.mxu0
  %v131 = vadd.f32 %v41, %v130
  %v132 = vpop.f32.mrf.mxu0
  %v133 = vpop.f32.mrf.mxu0
  %v134 = vadd.f32 %v41, %v133
  %v135 = vpop.f32.mrf.mxu0
  %136 = vdwg.mxu0
  %v137 = vld [vmem:[%s3] sm:$0xf]
  %v138 = vld [vmem:[%s3 + $0x4] sm:$0xf]
  %v139 = vunpack.c.l.bf16 %v137
  %v140 = vunpack.c.l.bf16 %v138
  %v141 = vadd.f32 %v131, %v139
  %v142 = vadd.f32 %v134, %v140
  %v143 = vpack.c.bf16 %v142, %v141
  %v145 = vunpack.c.l.b16 %v143
  %v146 = vunpack.c.h.b16 %v143
  %v147 = vpack.c.b16 %v145, %v145
  %v148 = vpack.c.b16 %v146, %v146
  %vm151 = vcmask 257024
  %152 = vst.msk [vmem:[%s4] sm:$0xf] %vm151, %v147
  %153 = vst.msk [vmem:[%s4 + $0x4] sm:$0xf] %vm151, %v148
  // Predicated region
  $region18: #{_lambda_.15} parent=0 // pred_check
    _
  $region19: #{_lambda_.15} parent=0 // pred_check_branch
    %155 = sbr.rel (0) target = $region21
  $region20: #{_lambda_.15} parent=0 // pred_region
    _
  $region21: #{_lambda_.15} parent=0 // pred_fallthru
    _
  // Predicated region
  $region22: #{_lambda_.15} parent=0 // pred_check
    _
  $region23: #{_lambda_.15} parent=0 // pred_check_branch
    %157 = sbr.rel (0) target = $region25
  $region24: #{_lambda_.15} parent=0 // pred_region
    _
  $region25: #{_lambda_.15} parent=0 // pred_fallthru
    _

// kernel: _lambda_.21
$region0: #{_lambda_.21}
  #allocation0 [shape = 'u32[]', space=smem, size = 0x4, offset = 0x4, fixed_abs, tag = 'smem constant byte address 0x4 - core index']
  #allocation1 [shape = 'u32[144,128]{1,0:T(1,128)}', space=vmem, size = 0x12000, scoped, tag = 'internal scratch']
  %s0 = inlined_call_operand.vmem [shape: bf16[2,32], index: 0, kind: input, shape index: {}]
  %s1 = inlined_call_operand.vmem [shape: bf16[64,32], index: 1, kind: input, shape index: {}]
  %s2 = inlined_call_operand.vmem [shape: bf16[1,32], index: 2, kind: input, shape index: {}]
  %s3 = inlined_call_operand.vmem [shape: bf16[1,32], index: 3, kind: input, shape index: {}]
  %s4 = inlined_call_operand.hbm [shape: f32[2,64], index: 4, kind: output, shape index: {}]
  %s5 = sld [smem:[#allocation0]]
  $region26: #{_lambda_.21} parent=0
    _
  %s7 = ssub.s32 1, %s5
  %s8 = scalar_select 0, %s7, %s5
  $region1: #{_lambda_.21} parent=0
    #allocation2 [shape = 'u8[1024]{0}', space=vmem, size = 0x400, scoped, tag = 'output window, operand 0, single buffered']
    #allocation3 [shape = 's32[1]{0}', space=sflag, size = 0x4, scoped, tag = 'scoped memory for _lambda_.21']
    %9 = vsyncpa [#allocation3], 0
    // Predicated region
    $region2: #{_lambda_.21} parent=1 // pred_check
      _
    $region3: #{_lambda_.21} parent=1 // pred_check_branch
      %11 = sbr.rel (0) target = $region5
    $region4: #{_lambda_.21} parent=1 // pred_region
      _
    $region5: #{_lambda_.21} parent=1 // pred_fallthru
      _
    // Predicated region
    $region6: #{_lambda_.21} parent=1 // pred_check
      _
    $region7: #{_lambda_.21} parent=1 // pred_check_branch
      %13 = sbr.rel (0) target = $region9
    $region8: #{_lambda_.21} parent=1 // pred_region
      _
    $region9: #{_lambda_.21} parent=1 // pred_fallthru
      _
    // Predicated region
    $region10: #{_lambda_.21} parent=1 // pred_check
      _
    $region11: #{_lambda_.21} parent=1 // pred_check_branch
      %15 = sbr.rel (0) target = $region13
    $region12: #{_lambda_.21} parent=1 // pred_region
      _
    $region13: #{_lambda_.21} parent=1 // pred_fallthru
      _
    // Predicated region
    $region14: #{_lambda_.21} parent=1 // pred_check
      _
    $region15: #{_lambda_.21} parent=1 // pred_check_branch
      %17 = sbr.rel (0) target = $region17
    $region16: #{_lambda_.21} parent=1 // pred_region
      _
    $region17: #{_lambda_.21} parent=1 // pred_fallthru
      _
    %v19 = vld [vmem:[%s0] sm:$0x1]
    %v20 = vunpack.c.l.bf16 %v19
    %vm21 = vcmask 254976
    %v22 = vsel %vm21, %v20, 0.0
    %23 = vadd.xlane.f32.xlu0 %v22
    %v24 = vpop.xlane.xlu0 %23
    %v25 = vrcp.pop 32.0
    %v26 = vmul.f32 %v24, %v25
    %v27 = vsub.f32 %v20, %v26
    %v28 = vmul.f32 %v27, %v27
    %v29 = vsel %vm21, %v28, 0.0
    %30 = vadd.xlane.f32.xlu0 %v29
    %v31 = vpop.xlane.xlu0 %30
    %v32 = vmul.f32 %v31, %v25
    %v33 = vadd.f32 %v32, 1e-05
    %v34 = vrsqrt.pop %v33
    %v35 = vmul.f32 %v27, %v34
    %v36 = vld [vmem:[%s2] sm:$0x1]
    %v37 = vunpack.c.l.bf16 %v36
    %v38 = vlaneseq
    %v39 = vshrl.u32 %v38, 7
    %v40 = vsub.s32 0, %v39
    %v41 = vrot.slane %v37, %v40
    %v42 = vmul.f32 %v35, %v41
    %v43 = vld [vmem:[%s3] sm:$0x1]
    %v44 = vunpack.c.l.bf16 %v43
    %v45 = vlaneseq
    %v46 = vshrl.u32 %v45, 7
    %v47 = vsub.s32 0, %v46
    %v48 = vrot.slane %v44, %v47
    %v49 = vadd.f32 %v42, %v48
    %v50 = vpack.c.bf16 %v49, %v49
    %v51 = vld [vmem:[%s1] sm:$0xf]
    %v52 = vld [vmem:[%s1 + $0x4] sm:$0xf]
    %v53 = vld [vmem:[%s1 + $0x8] sm:$0xf]
    %v54 = vld [vmem:[%s1 + $0xc] sm:$0xf]
    %v55 = vld [vmem:[%s1 + $0x10] sm:$0xf]
    %v56 = vld [vmem:[%s1 + $0x14] sm:$0xf]
    %v57 = vld [vmem:[%s1 + $0x18] sm:$0xf]
    %v58 = vld [vmem:[%s1 + $0x1c] sm:$0xf]
    %v67 = vunpack.c.l.b16 %v51
    %v68 = vunpack.c.l.b16 %v52
    %v69 = vunpack.c.l.b16 %v53
    %v70 = vunpack.c.l.b16 %v54
    %v71 = vunpack.c.l.b16 %v55
    %v72 = vunpack.c.l.b16 %v56
    %v73 = vunpack.c.l.b16 %v57
    %v74 = vunpack.c.l.b16 %v58
    %v75 = vpack.c.b16 %v68, %v67
    %v76 = vpack.c.b16 %v70, %v69
    %v77 = vpack.c.b16 %v72, %v71
    %v78 = vpack.c.b16 %v74, %v73
    %vm79 = vcmask 261120
    %v81 = vsel %vm79, %v50, 0
    %v84 = vsel %vm79, %v75, 0
    %v87 = vsel %vm79, %v76, 0
    %v90 = vsel %vm79, %v77, 0
    %v93 = vsel %vm79, %v78, 0
    %95 = vmatprep.subr.bf16.mxu0 0
    %96 = vmatpush1.bf16.xpose.msra.mxu0 0
    %97 = vmatprep.subr.bf16.mxu0 0
    %98 = vmatpush1.bf16.xpose.msra.mxu0 0
    %99 = vmatprep.subr.bf16.mxu0 0
    %100 = vmatpush1.bf16.xpose.msra.mxu0 0
    %101 = vmatprep.subr.bf16.mxu0 0
    %102 = vmatpush1.bf16.xpose.msra.mxu0 0
    %103 = vmatprep.subr.bf16.mxu0 0
    %104 = vmatpush1.bf16.xpose.msra.mxu0 %v93
    %105 = vmatprep.subr.bf16.mxu0 0
    %106 = vmatpush1.bf16.xpose.msra.mxu0 %v90
    %107 = vmatprep.subr.bf16.mxu0 0
    %108 = vmatpush1.bf16.xpose.msra.mxu0 %v87
    %109 = vmatprep.subr.bf16.mxu0 0
    %110 = vmatpush1.bf16.xpose.msra.mxu0 %v84
    %111 = vmatprep.subr.bf16.mxu0 0
    %112 = vmatpush2.bf16.xpose.msra.mxu0 0
    %113 = vmatprep.subr.bf16.mxu0 0
    %114 = vmatpush2.bf16.xpose.msra.mxu0 0
    %115 = vmatprep.subr.bf16.mxu0 0
    %116 = vmatpush2.bf16.xpose.msra.mxu0 0
    %117 = vmatprep.subr.bf16.mxu0 0
    %118 = vmatpush2.bf16.xpose.msra.mxu0 0
    %119 = vmatprep.subr.bf16.mxu0 0
    %120 = vmatpush2.bf16.xpose.msra.mxu0 0
    %121 = vmatprep.subr.bf16.mxu0 0
    %122 = vmatpush2.bf16.xpose.msra.mxu0 0
    %123 = vmatprep.subr.bf16.mxu0 0
    %124 = vmatpush2.bf16.xpose.msra.mxu0 0
    %125 = vmatprep.subr.bf16.mxu0 0
    %126 = vmatpush2.bf16.xpose.msra.mxu0 0
    %127 = vmatprep.mubr.bf16.mxu0 0
    %128 = vmatmul.mubr.bf16.gmra.mxu0 %v81
    %v129 = vpop.f32.mrf.mxu0
    %v130 = vadd.f32 0.0, %v129
    %v131 = vpop.f32.mrf.mxu0
    %v132 = vpop.f32.mrf.mxu0
    %v133 = vpop.f32.mrf.mxu0
    %134 = vdwg.mxu0
    %vm135 = vcmask 517120
    %136 = vst.msk [vmem:[#allocation2] sm:$0x3] %vm135, %v130
    // Predicated region
    $region18: #{_lambda_.21} parent=1 // pred_check
      _
    $region19: #{_lambda_.21} parent=1 // pred_check_branch
      %138 = sbr.rel (0) target = $region21
    $region20: #{_lambda_.21} parent=1 // pred_region
      %s140 = ssub.s32 32, 32
      %141 = vsyncadd [#allocation3], %s140
      %s143 = sshll.u32 [#allocation2], 4
      %s144 = int_to_ptr.vmem [resolvable:$true] %s143
      %146 = dma.vmem_to_hbm [thread:$0]  %s144, 32, %s4, [#allocation3]
    $region21: #{_lambda_.21} parent=1 // pred_fallthru
      _
    // Predicated region
    $region22: #{_lambda_.21} parent=1 // pred_check
      _
    $region23: #{_lambda_.21} parent=1 // pred_check_branch
      %148 = sbr.rel (0) target = $region25
    $region24: #{_lambda_.21} parent=1 // pred_region
      %149 = dma.done [#allocation3], 32
    $region25: #{_lambda_.21} parent=1 // pred_fallthru
      _
    %150 = vsyncpa [#allocation3], 1

</llo_original>
